<compile_context>
chip_gen: v7x
topology: tpu7x:2x2x1
jax: 0.10.0
libtpu: 0.0.40
codegen_flags: <defaults>
</compile_context>

<pallas_src>
import functools
import math

import jax
import jax.numpy as jnp
from jax import lax
from jax.experimental import pallas as pl
from jax.experimental.pallas import tpu as pltpu


def _mha_kernel(q_ref, k_ref, v_ref,
                wq_ref, bq_ref, wk_ref, bk_ref, wv_ref, bv_ref,
                wf_ref, bf_ref,
                out_ref,
                kproj_ref, vproj_ref, head_ref,
                *, num_heads, d_k, d_v, inv_temper):
    f32 = jnp.float32
    bf16 = jnp.bfloat16

    # K/V projections depend only on the batch row (grid axis 0).  The query
    # tile axis (grid axis 1) is "arbitrary", so compute them once per batch
    # row and keep them resident in VMEM scratch as bf16.
    @pl.when(pl.program_id(1) == 0)
    def _():
        kb = k_ref[0].astype(bf16)                                    # (N, d_model)
        vb = v_ref[0].astype(bf16)                                    # (N, d_model)
        kproj_ref[...] = (jnp.dot(kb, wk_ref[...], preferred_element_type=f32)
                          + bk_ref[...]).astype(bf16)                 # (N, H*d_k)
        vproj_ref[...] = (jnp.dot(vb, wv_ref[...], preferred_element_type=f32)
                          + bv_ref[...]).astype(bf16)                 # (N, H*d_v)

    # Q projection for this query tile; 1/temper folded in so there is no
    # per-head (TQ, N) score divide.
    qb = q_ref[0].astype(bf16)                                        # (TQ, d_model)
    q_proj = ((jnp.dot(qb, wq_ref[...], preferred_element_type=f32)
               + bq_ref[...]) * inv_temper).astype(bf16)              # (TQ, H*d_k)

    k_proj = kproj_ref[...]                                           # (N, H*d_k) bf16
    v_proj = vproj_ref[...]                                           # (N, H*d_v) bf16

    # Per-head attention.  Head outputs are staged into a (TQ, H*d_v) bf16
    # VMEM buffer so (a) per-head temporaries die at each store and (b) the
    # final output projection is a single full-depth, lane-dense matmul.
    for h in range(num_heads):                                        # static unroll
        qh = q_proj[:, h * d_k:(h + 1) * d_k]                         # (TQ, d_k)
        kh = k_proj[:, h * d_k:(h + 1) * d_k]                         # (N,  d_k)
        vh = v_proj[:, h * d_v:(h + 1) * d_v]                         # (N,  d_v)

        # Q @ K^T via transposed-RHS contraction (no materialized transpose).
        scores = lax.dot_general(qh, kh, (((1,), (1,)), ((), ())),
                                 preferred_element_type=f32)          # (TQ, N)

        # Numerically-stable softmax, normalization deferred past the PV matmul.
        scores = scores - jnp.max(scores, axis=-1, keepdims=True)
        e = jnp.exp(scores)                                           # f32 (TQ, N)
        denom = jnp.sum(e, axis=-1, keepdims=True)                    # f32 (TQ, 1)

        head_out = jnp.dot(e.astype(bf16), vh,
                           preferred_element_type=f32)                # (TQ, d_v)
        head_out = head_out * pl.reciprocal(denom, approx=True)
        head_ref[:, h * d_v:(h + 1) * d_v] = head_out.astype(bf16)

    # concat-over-heads + final Linear == one (TQ, H*d_v) @ (H*d_v, d_model).
    out = (jnp.dot(head_ref[...], wf_ref[...], preferred_element_type=f32)
           + bf_ref[...])                                             # (TQ, d_model)
    out_ref[0] = out.astype(out_ref.dtype)


def prepare_params(params):
    """One-time fusion of per-head weights into lane-dense bf16 matrices.

    Hoisted out of the forward call so the transpose/reshape/cast of the
    ~4*d_model^2 weight bytes is not re-run (re-read from HBM) every call.
    """
    wq, bq, wk, bk, wv, bv, wf_h, bf = params
    H, d_model, d_k = wq.shape
    d_v = wv.shape[-1]
    wq_f = jnp.transpose(wq, (1, 0, 2)).reshape(d_model, H * d_k).astype(jnp.bfloat16)
    wk_f = jnp.transpose(wk, (1, 0, 2)).reshape(d_model, H * d_k).astype(jnp.bfloat16)
    wv_f = jnp.transpose(wv, (1, 0, 2)).reshape(d_model, H * d_v).astype(jnp.bfloat16)
    bq_f = bq.reshape(1, H * d_k).astype(jnp.float32)
    bk_f = bk.reshape(1, H * d_k).astype(jnp.float32)
    bv_f = bv.reshape(1, H * d_v).astype(jnp.float32)
    wf_f = wf_h.reshape(H * d_v, d_model).astype(jnp.bfloat16)   # concat over heads
    bf_f = bf.reshape(1, d_model).astype(jnp.float32)
    return (H, d_k, d_v, wq_f, bq_f, wk_f, bk_f, wv_f, bv_f, wf_f, bf_f)


def multi_head_attention(q, k, v, fused_params):
    """q, k, v: (B, N, d_model).  Returns (B, N, d_model) in q.dtype.

    Prefer feeding q/k/v already in bf16 from the producer; the kernel casts
    to bf16 before every MXU use either way.
    """
    H, d_k, d_v, wq_f, bq_f, wk_f, bk_f, wv_f, bv_f, wf_f, bf_f = fused_params
    B, N, d_model = q.shape
    inv_temper = 1.0 / math.sqrt(float(d_k))

    try:
        kind = jax.devices()[0].device_kind.lower()
    except Exception:  # pragma: no cover - defensive
        kind = ""

    # Query-tile size: 256 default, 128 on v7x at large N (VMEM pressure),
    # full-N fallback for small/odd N (block == full array satisfies tiling).
    tq_cap = 128 if ("v7" in kind and N >= 2048) else 256
    tq = N
    for t in (tq_cap, 128):
        if t <= N and N % t == 0:
            tq = t
            break

    # Explicit VMEM budget: pipelined operand blocks (x2 for double-buffering)
    # + persistent scratch, with headroom, clamped to the physical limit.
    in_b = q.dtype.itemsize
    operand_bytes = (
        tq * d_model * in_b                       # q tile
        + 2 * N * d_model * in_b                  # k + v row blocks
        + tq * d_model * q.dtype.itemsize         # out tile
        + 2 * d_model * (H * d_k) * 2             # wq + wk (bf16)
        + d_model * (H * d_v) * 2                 # wv (bf16)
        + (H * d_v) * d_model * 2                 # wf (bf16)
        + (2 * H * d_k + H * d_v + d_model) * 4)  # biases (f32)
    scratch_bytes = (N * H * d_k + N * H * d_v + tq * H * d_v) * 2
    est = 2 * operand_bytes + scratch_bytes
    phys_vmem = (64 if "v7" in kind else 128) * 1024 * 1024
    vmem_limit = min(max(int(est * 1.5), 32 * 1024 * 1024), phys_vmem)

    kernel = functools.partial(_mha_kernel, num_heads=H, d_k=d_k, d_v=d_v,
                               inv_temper=inv_temper)

    q_spec = pl.BlockSpec((1, tq, d_model), lambda b, i: (b, i, 0))
    kv_spec = pl.BlockSpec((1, N, d_model), lambda b, i: (b, 0, 0))
    out_spec = pl.BlockSpec((1, tq, d_model), lambda b, i: (b, i, 0))

    def w_spec(rows, cols):
        # Constant index_map: each weight is DMA'd into VMEM exactly once.
        return pl.BlockSpec((rows, cols), lambda b, i: (0, 0))

    return pl.pallas_call(
        kernel,
        out_shape=jax.ShapeDtypeStruct((B, N, d_model), q.dtype),
        grid_spec=pltpu.PrefetchScalarGridSpec(
            num_scalar_prefetch=0,
            grid=(B, N // tq),
            in_specs=[q_spec, kv_spec, kv_spec,
                      w_spec(d_model, H * d_k), w_spec(1, H * d_k),
                      w_spec(d_model, H * d_k), w_spec(1, H * d_k),
                      w_spec(d_model, H * d_v), w_spec(1, H * d_v),
                      w_spec(H * d_v, d_model), w_spec(1, d_model)],
            out_specs=out_spec,
            scratch_shapes=[
                pltpu.VMEM((N, H * d_k), jnp.bfloat16),   # K projection (per batch row)
                pltpu.VMEM((N, H * d_v), jnp.bfloat16),   # V projection (per batch row)
                pltpu.VMEM((tq, H * d_v), jnp.bfloat16),  # head-output staging
            ]),
        # Query-tile axis carries the K/V-projection scratch -> "arbitrary".
        compiler_params=pltpu.CompilerParams(
            dimension_semantics=("parallel", "arbitrary"),
            vmem_limit_bytes=vmem_limit),
    )(q, k, v, wq_f, bq_f, wk_f, bk_f, wv_f, bv_f, wf_f, bf_f)


def _reference(q, k, v, params):
    """Pure-JAX f32 reference mirroring the PyTorch module."""
    wq, bq, wk, bk, wv, bv, wf_h, bf = params
    H, d_model, d_k = wq.shape
    temper = float(d_k) ** 0.5
    heads = []
    for h in range(H):
        qh = q @ wq[h] + bq[h, 0]
        kh = k @ wk[h] + bk[h, 0]
        vh = v @ wv[h] + bv[h, 0]
        attn = jnp.einsum("bnd,bmd->bnm", qh, kh) / temper
        attn = jax.nn.softmax(attn, axis=-1)
        heads.append(jnp.einsum("bnm,bmd->bnd", attn, vh))
    cat = jnp.concatenate(heads, axis=-1)
    wf = jnp.concatenate([wf_h[h] for h in range(H)], axis=0)   # (d_model, d_model)
    return cat @ wf + bf[0]


def init_params(key, d_model, num_heads):
    d_k = d_model // num_heads
    d_v = d_model // num_heads
    ks = jax.random.split(key, 8)
    s = 0.1
    wq = s * jax.random.normal(ks[0], (num_heads, d_model, d_k), jnp.float32)
    bq = s * jax.random.normal(ks[1], (num_heads, 1, d_k), jnp.float32)
    wk = s * jax.random.normal(ks[2], (num_heads, d_model, d_k), jnp.float32)
    bk = s * jax.random.normal(ks[3], (num_heads, 1, d_k), jnp.float32)
    wv = s * jax.random.normal(ks[4], (num_heads, d_model, d_v), jnp.float32)
    bv = s * jax.random.normal(ks[5], (num_heads, 1, d_v), jnp.float32)
    # Final linear weight, pre-split by head-block along its input axis.
    wf_h = s * jax.random.normal(ks[6], (num_heads, d_v, d_model), jnp.float32)
    bf = s * jax.random.normal(ks[7], (1, d_model), jnp.float32)
    return (wq, bq, wk, bk, wv, bv, wf_h, bf)


if __name__ == "__main__":
    B, N, d_model, num_heads = 2, 8, 32, 4

    key = jax.random.PRNGKey(0)
    kq, kk, kv, kp = jax.random.split(key, 4)
    q = jax.random.normal(kq, (B, N, d_model), jnp.float32)
    k = jax.random.normal(kk, (B, N, d_model), jnp.float32)
    v = jax.random.normal(kv, (B, N, d_model), jnp.float32)
    params = init_params(kp, d_model, num_heads)

    fused = prepare_params(params)          # one-time weight fusion / bf16 cast
    out = jax.block_until_ready(multi_head_attention(q, k, v, fused))
    ref = _reference(q, k, v, params)

    # bf16 MXU operands + approx reciprocal => compare at bf16-level tolerance.
    if not jnp.allclose(out, ref, atol=5e-2, rtol=5e-2):
        max_err = float(jnp.max(jnp.abs(out - ref)))
        raise AssertionError(f"Pallas MHA output mismatch, max abs err={max_err}")

    print("KERNEL_OK")
</pallas_src>

<mosaic_0001>
module attributes {stable_mosaic.version = 11 : i64} {
  func.func @_mha_kernel(%arg0: i32, %arg1: i32, %arg2: memref<1x8x32xf32, #tpu.memory_space<vmem>>, %arg3: memref<1x8x32xf32, #tpu.memory_space<vmem>>, %arg4: memref<1x8x32xf32, #tpu.memory_space<vmem>>, %arg5: memref<32x32xbf16, #tpu.memory_space<vmem>>, %arg6: memref<1x32xf32, #tpu.memory_space<vmem>>, %arg7: memref<32x32xbf16, #tpu.memory_space<vmem>>, %arg8: memref<1x32xf32, #tpu.memory_space<vmem>>, %arg9: memref<32x32xbf16, #tpu.memory_space<vmem>>, %arg10: memref<1x32xf32, #tpu.memory_space<vmem>>, %arg11: memref<32x32xbf16, #tpu.memory_space<vmem>>, %arg12: memref<1x32xf32, #tpu.memory_space<vmem>>, %arg13: memref<1x8x32xf32, #tpu.memory_space<vmem>>, %arg14: memref<8x32xbf16, #tpu.memory_space<vmem>>, %arg15: memref<8x32xbf16, #tpu.memory_space<vmem>>, %arg16: memref<8x32xbf16, #tpu.memory_space<vmem>>) attributes {dimension_semantics = [#tpu.dimension_semantics<parallel>, #tpu.dimension_semantics<arbitrary>], iteration_bounds = array<i64: 2, 1>, scalar_prefetch = 0 : i64, scratch_operands = 3 : i64, tpu.core_type = #tpu.core_type<tc>, window_params = [{transform_indices = @transform_0, window_bounds = array<i64: 1, 8, 32>}, {transform_indices = @transform_1, window_bounds = array<i64: 1, 8, 32>}, {transform_indices = @transform_2, window_bounds = array<i64: 1, 8, 32>}, {pipeline_mode = #tpu.pipeline_mode<synchronous>, transform_indices = @transform_3, window_bounds = array<i64: 32, 32>}, {pipeline_mode = #tpu.pipeline_mode<synchronous>, transform_indices = @transform_4, window_bounds = array<i64: 1, 32>}, {pipeline_mode = #tpu.pipeline_mode<synchronous>, transform_indices = @transform_5, window_bounds = array<i64: 32, 32>}, {pipeline_mode = #tpu.pipeline_mode<synchronous>, transform_indices = @transform_6, window_bounds = array<i64: 1, 32>}, {pipeline_mode = #tpu.pipeline_mode<synchronous>, transform_indices = @transform_7, window_bounds = array<i64: 32, 32>}, {pipeline_mode = #tpu.pipeline_mode<synchronous>, transform_indices = @transform_8, window_bounds = array<i64: 1, 32>}, {pipeline_mode = #tpu.pipeline_mode<synchronous>, transform_indices = @transform_9, window_bounds = array<i64: 32, 32>}, {pipeline_mode = #tpu.pipeline_mode<synchronous>, transform_indices = @transform_10, window_bounds = array<i64: 1, 32>}, {transform_indices = @transform_11, window_bounds = array<i64: 1, 8, 32>}]} {
    %c0_i32 = arith.constant 0 : i32
    %0 = arith.cmpi eq, %arg1, %c0_i32 : i32
    %1 = arith.extui %0 : i1 to i32
    %c0_i32_0 = arith.constant 0 : i32
    %2 = arith.cmpi ne, %1, %c0_i32_0 : i32
    scf.if %2 {
      %c0_43 = arith.constant 0 : index
      %c0_44 = arith.constant 0 : index
      %c0_45 = arith.constant 0 : index
      %97 = vector.load %arg3[%c0_43, %c0_44, %c0_45] : memref<1x8x32xf32, #tpu.memory_space<vmem>>, vector<1x8x32xf32>
      %98 = vector.shape_cast %97 : vector<1x8x32xf32> to vector<8x32xf32>
      %99 = arith.truncf %98 : vector<8x32xf32> to vector<8x32xbf16>
      %c0_46 = arith.constant 0 : index
      %c0_47 = arith.constant 0 : index
      %c0_48 = arith.constant 0 : index
      %100 = vector.load %arg4[%c0_46, %c0_47, %c0_48] : memref<1x8x32xf32, #tpu.memory_space<vmem>>, vector<1x8x32xf32>
      %101 = vector.shape_cast %100 : vector<1x8x32xf32> to vector<8x32xf32>
      %102 = arith.truncf %101 : vector<8x32xf32> to vector<8x32xbf16>
      %c0_49 = arith.constant 0 : index
      %c0_50 = arith.constant 0 : index
      %103 = vector.load %arg7[%c0_49, %c0_50] : memref<32x32xbf16, #tpu.memory_space<vmem>>, vector<32x32xbf16>
      %cst_51 = arith.constant dense<0.000000e+00> : vector<8x32xf32>
      %104 = tpu.matmul %99, %103, %cst_51 {dimension_numbers = #tpu.dot_dimension_numbers<[1], [0], [0], [1], [0, 0, 1, 1], [], []>} : vector<8x32xbf16>, vector<32x32xbf16>, vector<8x32xf32> -> vector<8x32xf32>
      %c0_52 = arith.constant 0 : index
      %c0_53 = arith.constant 0 : index
      %105 = vector.load %arg8[%c0_52, %c0_53] : memref<1x32xf32, #tpu.memory_space<vmem>>, vector<1x32xf32>
      %106 = vector.broadcast %105 : vector<1x32xf32> to vector<8x32xf32>
      %107 = arith.addf %104, %106 : vector<8x32xf32>
      %108 = arith.truncf %107 : vector<8x32xf32> to vector<8x32xbf16>
      %c0_54 = arith.constant 0 : index
      %c0_55 = arith.constant 0 : index
      %109 = vector.load %arg14[%c0_54, %c0_55] : memref<8x32xbf16, #tpu.memory_space<vmem>>, vector<8x32xbf16>
      tpu.vector_store %arg14[%c0_54, %c0_55], %108 {strides = array<i32>} : memref<8x32xbf16, #tpu.memory_space<vmem>>, vector<8x32xbf16>,
      %c0_56 = arith.constant 0 : index
      %c0_57 = arith.constant 0 : index
      %110 = vector.load %arg9[%c0_56, %c0_57] : memref<32x32xbf16, #tpu.memory_space<vmem>>, vector<32x32xbf16>
      %cst_58 = arith.constant dense<0.000000e+00> : vector<8x32xf32>
      %111 = tpu.matmul %102, %110, %cst_58 {dimension_numbers = #tpu.dot_dimension_numbers<[1], [0], [0], [1], [0, 0, 1, 1], [], []>} : vector<8x32xbf16>, vector<32x32xbf16>, vector<8x32xf32> -> vector<8x32xf32>
      %c0_59 = arith.constant 0 : index
      %c0_60 = arith.constant 0 : index
      %112 = vector.load %arg10[%c0_59, %c0_60] : memref<1x32xf32, #tpu.memory_space<vmem>>, vector<1x32xf32>
      %113 = vector.broadcast %112 : vector<1x32xf32> to vector<8x32xf32>
      %114 = arith.addf %111, %113 : vector<8x32xf32>
      %115 = arith.truncf %114 : vector<8x32xf32> to vector<8x32xbf16>
      %c0_61 = arith.constant 0 : index
      %c0_62 = arith.constant 0 : index
      %116 = vector.load %arg15[%c0_61, %c0_62] : memref<8x32xbf16, #tpu.memory_space<vmem>>, vector<8x32xbf16>
      tpu.vector_store %arg15[%c0_61, %c0_62], %115 {strides = array<i32>} : memref<8x32xbf16, #tpu.memory_space<vmem>>, vector<8x32xbf16>,
    } else {
    }
    %c0 = arith.constant 0 : index
    %c0_1 = arith.constant 0 : index
    %c0_2 = arith.constant 0 : index
    %3 = vector.load %arg2[%c0, %c0_1, %c0_2] : memref<1x8x32xf32, #tpu.memory_space<vmem>>, vector<1x8x32xf32>
    %4 = vector.shape_cast %3 : vector<1x8x32xf32> to vector<8x32xf32>
    %5 = arith.truncf %4 : vector<8x32xf32> to vector<8x32xbf16>
    %c0_3 = arith.constant 0 : index
    %c0_4 = arith.constant 0 : index
    %6 = vector.load %arg5[%c0_3, %c0_4] : memref<32x32xbf16, #tpu.memory_space<vmem>>, vector<32x32xbf16>
    %cst = arith.constant dense<0.000000e+00> : vector<8x32xf32>
    %7 = tpu.matmul %5, %6, %cst {dimension_numbers = #tpu.dot_dimension_numbers<[1], [0], [0], [1], [0, 0, 1, 1], [], []>} : vector<8x32xbf16>, vector<32x32xbf16>, vector<8x32xf32> -> vector<8x32xf32>
    %c0_5 = arith.constant 0 : index
    %c0_6 = arith.constant 0 : index
    %8 = vector.load %arg6[%c0_5, %c0_6] : memref<1x32xf32, #tpu.memory_space<vmem>>, vector<1x32xf32>
    %9 = vector.broadcast %8 : vector<1x32xf32> to vector<8x32xf32>
    %10 = arith.addf %7, %9 : vector<8x32xf32>
    %cst_7 = arith.constant 0.353553385 : f32
    %11 = vector.broadcast %cst_7 : f32 to vector<8x32xf32>
    %12 = arith.mulf %10, %11 : vector<8x32xf32>
    %13 = arith.truncf %12 : vector<8x32xf32> to vector<8x32xbf16>
    %c0_8 = arith.constant 0 : index
    %c0_9 = arith.constant 0 : index
    %14 = vector.load %arg14[%c0_8, %c0_9] : memref<8x32xbf16, #tpu.memory_space<vmem>>, vector<8x32xbf16>
    %c0_10 = arith.constant 0 : index
    %c0_11 = arith.constant 0 : index
    %15 = vector.load %arg15[%c0_10, %c0_11] : memref<8x32xbf16, #tpu.memory_space<vmem>>, vector<8x32xbf16>
    %16 = vector.extract_strided_slice %13 {offsets = [0, 0], sizes = [8, 8], strides = [1, 1]} : vector<8x32xbf16> to vector<8x8xbf16>
    %17 = vector.extract_strided_slice %14 {offsets = [0, 0], sizes = [8, 8], strides = [1, 1]} : vector<8x32xbf16> to vector<8x8xbf16>
    %18 = vector.extract_strided_slice %15 {offsets = [0, 0], sizes = [8, 8], strides = [1, 1]} : vector<8x32xbf16> to vector<8x8xbf16>
    %cst_12 = arith.constant dense<0.000000e+00> : vector<8x8xf32>
    %19 = tpu.matmul %16, %17, %cst_12 {dimension_numbers = #tpu.dot_dimension_numbers<[1], [1], [0], [0], [0, 0, 1, 0], [], []>} : vector<8x8xbf16>, vector<8x8xbf16>, vector<8x8xf32> -> vector<8x8xf32>
    %cst_13 = arith.constant dense<0xFF800000> : vector<8xf32>
    %20 = vector.multi_reduction <maximumf>, %19, %cst_13 [1] : vector<8x8xf32> to vector<8xf32>
    %21 = vector.shape_cast %20 : vector<8xf32> to vector<8x1xf32>
    %22 = vector.broadcast %21 : vector<8x1xf32> to vector<8x8xf32>
    %23 = arith.subf %19, %22 : vector<8x8xf32>
    %24 = math.exp %23 : vector<8x8xf32>
    %cst_14 = arith.constant dense<0.000000e+00> : vector<8xf32>
    %25 = vector.multi_reduction <add>, %24, %cst_14 [1] : vector<8x8xf32> to vector<8xf32>
    %26 = vector.shape_cast %25 : vector<8xf32> to vector<8x1xf32>
    %27 = arith.truncf %24 : vector<8x8xf32> to vector<8x8xbf16>
    %cst_15 = arith.constant dense<0.000000e+00> : vector<8x8xf32>
    %28 = tpu.matmul %27, %18, %cst_15 {dimension_numbers = #tpu.dot_dimension_numbers<[1], [0], [0], [1], [0, 0, 1, 1], [], []>} : vector<8x8xbf16>, vector<8x8xbf16>, vector<8x8xf32> -> vector<8x8xf32>
    %29 = tpu.reciprocal %26 {approx = true} : vector<8x1xf32> -> vector<8x1xf32>
    %30 = vector.broadcast %29 : vector<8x1xf32> to vector<8x8xf32>
    %31 = arith.mulf %28, %30 : vector<8x8xf32>
    %32 = arith.truncf %31 : vector<8x8xf32> to vector<8x8xbf16>
    %c0_16 = arith.constant 0 : index
    %c0_17 = arith.constant 0 : index
    %33 = vector.load %arg16[%c0_16, %c0_17] : memref<8x32xbf16, #tpu.memory_space<vmem>>, vector<8x8xbf16>
    tpu.vector_store %arg16[%c0_16, %c0_17], %32 {strides = array<i32>} : memref<8x32xbf16, #tpu.memory_space<vmem>>, vector<8x8xbf16>,
    %34 = vector.extract_strided_slice %13 {offsets = [0, 8], sizes = [8, 8], strides = [1, 1]} : vector<8x32xbf16> to vector<8x8xbf16>
    %35 = vector.extract_strided_slice %14 {offsets = [0, 8], sizes = [8, 8], strides = [1, 1]} : vector<8x32xbf16> to vector<8x8xbf16>
    %36 = vector.extract_strided_slice %15 {offsets = [0, 8], sizes = [8, 8], strides = [1, 1]} : vector<8x32xbf16> to vector<8x8xbf16>
    %cst_18 = arith.constant dense<0.000000e+00> : vector<8x8xf32>
    %37 = tpu.matmul %34, %35, %cst_18 {dimension_numbers = #tpu.dot_dimension_numbers<[1], [1], [0], [0], [0, 0, 1, 0], [], []>} : vector<8x8xbf16>, vector<8x8xbf16>, vector<8x8xf32> -> vector<8x8xf32>
    %cst_19 = arith.constant dense<0xFF800000> : vector<8xf32>
    %38 = vector.multi_reduction <maximumf>, %37, %cst_19 [1] : vector<8x8xf32> to vector<8xf32>
    %39 = vector.shape_cast %38 : vector<8xf32> to vector<8x1xf32>
    %40 = vector.broadcast %39 : vector<8x1xf32> to vector<8x8xf32>
    %41 = arith.subf %37, %40 : vector<8x8xf32>
    %42 = math.exp %41 : vector<8x8xf32>
    %cst_20 = arith.constant dense<0.000000e+00> : vector<8xf32>
    %43 = vector.multi_reduction <add>, %42, %cst_20 [1] : vector<8x8xf32> to vector<8xf32>
    %44 = vector.shape_cast %43 : vector<8xf32> to vector<8x1xf32>
    %45 = arith.truncf %42 : vector<8x8xf32> to vector<8x8xbf16>
    %cst_21 = arith.constant dense<0.000000e+00> : vector<8x8xf32>
    %46 = tpu.matmul %45, %36, %cst_21 {dimension_numbers = #tpu.dot_dimension_numbers<[1], [0], [0], [1], [0, 0, 1, 1], [], []>} : vector<8x8xbf16>, vector<8x8xbf16>, vector<8x8xf32> -> vector<8x8xf32>
    %47 = tpu.reciprocal %44 {approx = true} : vector<8x1xf32> -> vector<8x1xf32>
    %48 = vector.broadcast %47 : vector<8x1xf32> to vector<8x8xf32>
    %49 = arith.mulf %46, %48 : vector<8x8xf32>
    %50 = arith.truncf %49 : vector<8x8xf32> to vector<8x8xbf16>
    %c0_22 = arith.constant 0 : index
    %c8 = arith.constant 8 : index
    %51 = vector.load %arg16[%c0_22, %c8] : memref<8x32xbf16, #tpu.memory_space<vmem>>, vector<8x8xbf16>
    tpu.vector_store %arg16[%c0_22, %c8], %50 {strides = array<i32>} : memref<8x32xbf16, #tpu.memory_space<vmem>>, vector<8x8xbf16>,
    %52 = vector.extract_strided_slice %13 {offsets = [0, 16], sizes = [8, 8], strides = [1, 1]} : vector<8x32xbf16> to vector<8x8xbf16>
    %53 = vector.extract_strided_slice %14 {offsets = [0, 16], sizes = [8, 8], strides = [1, 1]} : vector<8x32xbf16> to vector<8x8xbf16>
    %54 = vector.extract_strided_slice %15 {offsets = [0, 16], sizes = [8, 8], strides = [1, 1]} : vector<8x32xbf16> to vector<8x8xbf16>
    %cst_23 = arith.constant dense<0.000000e+00> : vector<8x8xf32>
    %55 = tpu.matmul %52, %53, %cst_23 {dimension_numbers = #tpu.dot_dimension_numbers<[1], [1], [0], [0], [0, 0, 1, 0], [], []>} : vector<8x8xbf16>, vector<8x8xbf16>, vector<8x8xf32> -> vector<8x8xf32>
    %cst_24 = arith.constant dense<0xFF800000> : vector<8xf32>
    %56 = vector.multi_reduction <maximumf>, %55, %cst_24 [1] : vector<8x8xf32> to vector<8xf32>
    %57 = vector.shape_cast %56 : vector<8xf32> to vector<8x1xf32>
    %58 = vector.broadcast %57 : vector<8x1xf32> to vector<8x8xf32>
    %59 = arith.subf %55, %58 : vector<8x8xf32>
    %60 = math.exp %59 : vector<8x8xf32>
    %cst_25 = arith.constant dense<0.000000e+00> : vector<8xf32>
    %61 = vector.multi_reduction <add>, %60, %cst_25 [1] : vector<8x8xf32> to vector<8xf32>
    %62 = vector.shape_cast %61 : vector<8xf32> to vector<8x1xf32>
    %63 = arith.truncf %60 : vector<8x8xf32> to vector<8x8xbf16>
    %cst_26 = arith.constant dense<0.000000e+00> : vector<8x8xf32>
    %64 = tpu.matmul %63, %54, %cst_26 {dimension_numbers = #tpu.dot_dimension_numbers<[1], [0], [0], [1], [0, 0, 1, 1], [], []>} : vector<8x8xbf16>, vector<8x8xbf16>, vector<8x8xf32> -> vector<8x8xf32>
    %65 = tpu.reciprocal %62 {approx = true} : vector<8x1xf32> -> vector<8x1xf32>
    %66 = vector.broadcast %65 : vector<8x1xf32> to vector<8x8xf32>
    %67 = arith.mulf %64, %66 : vector<8x8xf32>
    %68 = arith.truncf %67 : vector<8x8xf32> to vector<8x8xbf16>
    %c0_27 = arith.constant 0 : index
    %c16 = arith.constant 16 : index
    %69 = vector.load %arg16[%c0_27, %c16] : memref<8x32xbf16, #tpu.memory_space<vmem>>, vector<8x8xbf16>
    tpu.vector_store %arg16[%c0_27, %c16], %68 {strides = array<i32>} : memref<8x32xbf16, #tpu.memory_space<vmem>>, vector<8x8xbf16>,
    %70 = vector.extract_strided_slice %13 {offsets = [0, 24], sizes = [8, 8], strides = [1, 1]} : vector<8x32xbf16> to vector<8x8xbf16>
    %71 = vector.extract_strided_slice %14 {offsets = [0, 24], sizes = [8, 8], strides = [1, 1]} : vector<8x32xbf16> to vector<8x8xbf16>
    %72 = vector.extract_strided_slice %15 {offsets = [0, 24], sizes = [8, 8], strides = [1, 1]} : vector<8x32xbf16> to vector<8x8xbf16>
    %cst_28 = arith.constant dense<0.000000e+00> : vector<8x8xf32>
    %73 = tpu.matmul %70, %71, %cst_28 {dimension_numbers = #tpu.dot_dimension_numbers<[1], [1], [0], [0], [0, 0, 1, 0], [], []>} : vector<8x8xbf16>, vector<8x8xbf16>, vector<8x8xf32> -> vector<8x8xf32>
    %cst_29 = arith.constant dense<0xFF800000> : vector<8xf32>
    %74 = vector.multi_reduction <maximumf>, %73, %cst_29 [1] : vector<8x8xf32> to vector<8xf32>
    %75 = vector.shape_cast %74 : vector<8xf32> to vector<8x1xf32>
    %76 = vector.broadcast %75 : vector<8x1xf32> to vector<8x8xf32>
    %77 = arith.subf %73, %76 : vector<8x8xf32>
    %78 = math.exp %77 : vector<8x8xf32>
    %cst_30 = arith.constant dense<0.000000e+00> : vector<8xf32>
    %79 = vector.multi_reduction <add>, %78, %cst_30 [1] : vector<8x8xf32> to vector<8xf32>
    %80 = vector.shape_cast %79 : vector<8xf32> to vector<8x1xf32>
    %81 = arith.truncf %78 : vector<8x8xf32> to vector<8x8xbf16>
    %cst_31 = arith.constant dense<0.000000e+00> : vector<8x8xf32>
    %82 = tpu.matmul %81, %72, %cst_31 {dimension_numbers = #tpu.dot_dimension_numbers<[1], [0], [0], [1], [0, 0, 1, 1], [], []>} : vector<8x8xbf16>, vector<8x8xbf16>, vector<8x8xf32> -> vector<8x8xf32>
    %83 = tpu.reciprocal %80 {approx = true} : vector<8x1xf32> -> vector<8x1xf32>
    %84 = vector.broadcast %83 : vector<8x1xf32> to vector<8x8xf32>
    %85 = arith.mulf %82, %84 : vector<8x8xf32>
    %86 = arith.truncf %85 : vector<8x8xf32> to vector<8x8xbf16>
    %c0_32 = arith.constant 0 : index
    %c24 = arith.constant 24 : index
    %87 = vector.load %arg16[%c0_32, %c24] : memref<8x32xbf16, #tpu.memory_space<vmem>>, vector<8x8xbf16>
    tpu.vector_store %arg16[%c0_32, %c24], %86 {strides = array<i32>} : memref<8x32xbf16, #tpu.memory_space<vmem>>, vector<8x8xbf16>,
    %c0_33 = arith.constant 0 : index
    %c0_34 = arith.constant 0 : index
    %88 = vector.load %arg16[%c0_33, %c0_34] : memref<8x32xbf16, #tpu.memory_space<vmem>>, vector<8x32xbf16>
    %c0_35 = arith.constant 0 : index
    %c0_36 = arith.constant 0 : index
    %89 = vector.load %arg11[%c0_35, %c0_36] : memref<32x32xbf16, #tpu.memory_space<vmem>>, vector<32x32xbf16>
    %cst_37 = arith.constant dense<0.000000e+00> : vector<8x32xf32>
    %90 = tpu.matmul %88, %89, %cst_37 {dimension_numbers = #tpu.dot_dimension_numbers<[1], [0], [0], [1], [0, 0, 1, 1], [], []>} : vector<8x32xbf16>, vector<32x32xbf16>, vector<8x32xf32> -> vector<8x32xf32>
    %c0_38 = arith.constant 0 : index
    %c0_39 = arith.constant 0 : index
    %91 = vector.load %arg12[%c0_38, %c0_39] : memref<1x32xf32, #tpu.memory_space<vmem>>, vector<1x32xf32>
    %92 = vector.broadcast %91 : vector<1x32xf32> to vector<8x32xf32>
    %93 = arith.addf %90, %92 : vector<8x32xf32>
    %c0_40 = arith.constant 0 : index
    %c0_41 = arith.constant 0 : index
    %c0_42 = arith.constant 0 : index
    %94 = vector.load %arg13[%c0_40, %c0_41, %c0_42] : memref<1x8x32xf32, #tpu.memory_space<vmem>>, vector<1x8x32xf32>
    %95 = vector.shape_cast %94 : vector<1x8x32xf32> to vector<8x32xf32>
    %96 = vector.shape_cast %93 : vector<8x32xf32> to vector<1x8x32xf32>
    tpu.vector_store %arg13[%c0_40, %c0_41, %c0_42], %96 {strides = array<i32>} : memref<1x8x32xf32, #tpu.memory_space<vmem>>, vector<1x8x32xf32>,
    return
  }
  func.func @transform_0(%arg0: i32, %arg1: i32) -> (i32, i32, i32) {
    %c0_i32 = arith.constant 0 : i32
    %c0_i32_0 = arith.constant 0 : i32
    return %arg0, %arg1, %c0_i32 : i32, i32, i32
  }
  func.func @transform_1(%arg0: i32, %arg1: i32) -> (i32, i32, i32) {
    %c0_i32 = arith.constant 0 : i32
    %c0_i32_0 = arith.constant 0 : i32
    %c0_i32_1 = arith.constant 0 : i32
    return %arg0, %c0_i32, %c0_i32_0 : i32, i32, i32
  }
  func.func @transform_2(%arg0: i32, %arg1: i32) -> (i32, i32, i32) {
    %c0_i32 = arith.constant 0 : i32
    %c0_i32_0 = arith.constant 0 : i32
    %c0_i32_1 = arith.constant 0 : i32
    return %arg0, %c0_i32, %c0_i32_0 : i32, i32, i32
  }
  func.func @transform_3(%arg0: i32, %arg1: i32) -> (i32, i32) {
    %c0_i32 = arith.constant 0 : i32
    %c0_i32_0 = arith.constant 0 : i32
    %c0_i32_1 = arith.constant 0 : i32
    return %c0_i32, %c0_i32_0 : i32, i32
  }
  func.func @transform_4(%arg0: i32, %arg1: i32) -> (i32, i32) {
    %c0_i32 = arith.constant 0 : i32
    %c0_i32_0 = arith.constant 0 : i32
    %c0_i32_1 = arith.constant 0 : i32
    return %c0_i32, %c0_i32_0 : i32, i32
  }
  func.func @transform_5(%arg0: i32, %arg1: i32) -> (i32, i32) {
    %c0_i32 = arith.constant 0 : i32
    %c0_i32_0 = arith.constant 0 : i32
    %c0_i32_1 = arith.constant 0 : i32
    return %c0_i32, %c0_i32_0 : i32, i32
  }
  func.func @transform_6(%arg0: i32, %arg1: i32) -> (i32, i32) {
    %c0_i32 = arith.constant 0 : i32
    %c0_i32_0 = arith.constant 0 : i32
    %c0_i32_1 = arith.constant 0 : i32
    return %c0_i32, %c0_i32_0 : i32, i32
  }
  func.func @transform_7(%arg0: i32, %arg1: i32) -> (i32, i32) {
    %c0_i32 = arith.constant 0 : i32
    %c0_i32_0 = arith.constant 0 : i32
    %c0_i32_1 = arith.constant 0 : i32
    return %c0_i32, %c0_i32_0 : i32, i32
  }
  func.func @transform_8(%arg0: i32, %arg1: i32) -> (i32, i32) {
    %c0_i32 = arith.constant 0 : i32
    %c0_i32_0 = arith.constant 0 : i32
    %c0_i32_1 = arith.constant 0 : i32
    return %c0_i32, %c0_i32_0 : i32, i32
  }
  func.func @transform_9(%arg0: i32, %arg1: i32) -> (i32, i32) {
    %c0_i32 = arith.constant 0 : i32
    %c0_i32_0 = arith.constant 0 : i32
    %c0_i32_1 = arith.constant 0 : i32
    return %c0_i32, %c0_i32_0 : i32, i32
  }
  func.func @transform_10(%arg0: i32, %arg1: i32) -> (i32, i32) {
    %c0_i32 = arith.constant 0 : i32
    %c0_i32_0 = arith.constant 0 : i32
    %c0_i32_1 = arith.constant 0 : i32
    return %c0_i32, %c0_i32_0 : i32, i32
  }
  func.func @transform_11(%arg0: i32, %arg1: i32) -> (i32, i32, i32) {
    %c0_i32 = arith.constant 0 : i32
    %c0_i32_0 = arith.constant 0 : i32
    return %arg0, %arg1, %c0_i32 : i32, i32, i32
  }
}

</mosaic_0001>

<llo_original>
// kernel: tpu_custom_call.1
$region0: #{tpu_custom_call.1}
  #allocation0 [shape = 'u32[]', space=smem, size = 0x4, offset = 0x4, fixed_abs, tag = 'smem constant byte address 0x4 - core index']
  #allocation1 [shape = 'u32[144,128]{1,0:T(1,128)}', space=vmem, size = 0x12000, scoped, tag = 'internal scratch']
  #allocation2 [shape = 'bf16[8,32]{1,0:T(8,128)(2,1)}', space=vmem, size = 0x800, scoped, tag = 'scratch operand']
  #allocation3 [shape = 'bf16[8,32]{1,0:T(8,128)(2,1)}', space=vmem, size = 0x800, scoped, tag = 'scratch operand']
  #allocation4 [shape = 'bf16[8,32]{1,0:T(8,128)(2,1)}', space=vmem, size = 0x800, scoped, tag = 'scratch operand']
  %s0 = inlined_call_operand.hbm [shape: f32[2,8,32], index: 0, kind: input, shape index: {}]
  %s1 = inlined_call_operand.hbm [shape: f32[2,8,32], index: 1, kind: input, shape index: {}]
  %s2 = inlined_call_operand.hbm [shape: f32[2,8,32], index: 2, kind: input, shape index: {}]
  %s3 = inlined_call_operand.hbm [shape: bf16[32,32], index: 3, kind: input, shape index: {}]
  %s4 = inlined_call_operand.vmem [shape: f32[1,32], index: 4, kind: input, shape index: {}]
  %s5 = inlined_call_operand.vmem [shape: bf16[32,32], index: 5, kind: input, shape index: {}]
  %s6 = inlined_call_operand.vmem [shape: f32[1,32], index: 6, kind: input, shape index: {}]
  %s7 = inlined_call_operand.hbm [shape: bf16[32,32], index: 7, kind: input, shape index: {}]
  %s8 = inlined_call_operand.hbm [shape: f32[1,32], index: 8, kind: input, shape index: {}]
  %s9 = inlined_call_operand.vmem [shape: bf16[32,32], index: 9, kind: input, shape index: {}]
  %s10 = inlined_call_operand.vmem [shape: f32[1,32], index: 10, kind: input, shape index: {}]
  %s11 = inlined_call_operand.hbm [shape: f32[2,8,32], index: 11, kind: output, shape index: {}]
  %s12 = sld [smem:[#allocation0]]
  $region105: #{tpu_custom_call.1} parent=0
    _
  %s14 = ssub.s32 1, %s12
  %s15 = scalar_select 0, %s14, %s12
  $region1: #{tpu_custom_call.1} parent=0
    #allocation5 [shape = 'u8[8192]{0}', space=vmem, size = 0x2000, scoped, tag = 'input window, operand 0']
    #allocation6 [shape = 's32[2]{0}', space=sflag, size = 0x8, scoped, tag = 'scoped memory for tpu_custom_call.1']
    #allocation7 [shape = 's32[2]{0}', space=sflag, size = 0x8, scoped, tag = 'scoped memory for tpu_custom_call.1']
    #allocation8 [shape = 'u8[8192]{0}', space=vmem, size = 0x2000, scoped, tag = 'input window, operand 1']
    #allocation9 [shape = 's32[2]{0}', space=sflag, size = 0x8, scoped, tag = 'scoped memory for tpu_custom_call.1']
    #allocation10 [shape = 'u8[8192]{0}', space=vmem, size = 0x2000, scoped, tag = 'input window, operand 2']
    #allocation11 [shape = 'u8[8192]{0}', space=vmem, size = 0x2000, scoped, tag = 'input window, operand 3, single buffered']
    #allocation12 [shape = 's32[1]{0}', space=sflag, size = 0x4, scoped, tag = 'scoped memory for tpu_custom_call.1']
    #allocation13 [shape = 'u8[8192]{0}', space=vmem, size = 0x2000, scoped, tag = 'input window, operand 7, single buffered']
    #allocation14 [shape = 'u8[512]{0}', space=vmem, size = 0x400, scoped, tag = 'input window, operand 8, single buffered']
    #allocation15 [shape = 's32[1]{0}', space=sflag, size = 0x4, scoped, tag = 'scoped memory for tpu_custom_call.1']
    #allocation16 [shape = 'u8[8192]{0}', space=vmem, size = 0x2000, scoped, tag = 'output window, operand 0']
    %16 = vsyncpa [#allocation6], 0
    %s17 = scalar_lea.sflag [#allocation6], 1
    %18 = vsyncpa %s17, 0
    %19 = vsyncpa [#allocation9], 0
    %s20 = scalar_lea.sflag [#allocation9], 1
    %21 = vsyncpa %s20, 0
    %22 = vsyncpa [#allocation12], 0
    %23 = vsyncpa [#allocation15], 0
    %24 = vsyncpa [#allocation7], 0
    %s25 = scalar_lea.sflag [#allocation7], 1
    %26 = vsyncpa %s25, 0
    loop: start=0, step=1, limit=4
    $region2: #{tpu_custom_call.1} parent=1 // loop_pre_header
      _
    $region3: #{tpu_custom_call.1} parent=1 // loop_header
      %s28 = sphi 0, %s32
      %p29 = scmp.ge.s32.totalorder %s28, 4
      %s35 = sphi 0, %s47
      %s36 = sphi 0, %s43
      %s37 = sphi 0, %s35
      %s38 = sphi 0, %s36
      %s39 = sphi 0, %s37
      %s40 = sphi 0, %s38
      %s52 = sphi 0, %s54
      %s55 = sphi 0, %s52
      %s56 = sphi 0, %s55
      %s72 = sphi 0, %s56
      %s78 = sphi 0, %s80
      %s81 = sphi 0, %s78
      %s82 = sphi 0, %s81
      %s98 = sphi 0, %s82
      %s104 = sphi 0, %s106
      %s107 = sphi 0, %s104
      %s108 = sphi 0, %s107
      %s124 = sphi 0, %s108
      %s128 = sphi 0, %s128
      %s130 = sphi 0, %s128
      %s131 = sphi 0, %s130
      %s145 = sphi 0, %s131
      %s149 = sphi 0, %s149
      %s151 = sphi 0, %s149
      %s152 = sphi 0, %s151
      %s166 = sphi 0, %s152
      %s170 = sphi 0, %s170
      %s172 = sphi 0, %s170
      %s173 = sphi 0, %s172
      %s187 = sphi 0, %s173
      %s191 = sphi 0, %s191
      %s193 = sphi 0, %s191
      %s194 = sphi 0, %s193
      %s208 = sphi 0, %s194
      %s212 = sphi 0, %s212
      %s214 = sphi 0, %s212
      %s215 = sphi 0, %s214
      %s229 = sphi 0, %s215
      %s233 = sphi 0, %s233
      %s235 = sphi 0, %s233
      %s236 = sphi 0, %s235
      %s250 = sphi 0, %s236
      %s254 = sphi 0, %s254
      %s256 = sphi 0, %s254
      %s257 = sphi 0, %s256
      %s271 = sphi 0, %s257
      %s275 = sphi 0, %s275
      %s277 = sphi 0, %s275
      %s278 = sphi 0, %s277
      %s292 = sphi 0, %s278
      %s300 = sphi 0, %s302
      %s303 = sphi 0, %s300
      %s304 = sphi 0, %s303
      %s320 = sphi 0, %s304
    $region4: #{tpu_custom_call.1} parent=1 // loop_header_branch
      %31 = sbr.rel (%p29) target = $region8
    $region5: #{tpu_custom_call.1} parent=1 // loop_body
      %s33 = ssub.s32 %s28, 1
      %s34 = ssub.s32 %s28, 2
      %s41 = sadd.s32 1, %s36
      %p42 = scmp.ge.s32.totalorder %s41, 1
      %s43 = scalar_select %p42, 0, %s41
      %s44 = sadd.s32 1, %s35
      %s45 = scalar_select %p42, %s44, %s35
      %p46 = scmp.ge.s32.totalorder %s45, 2
      %s47 = scalar_select %p46, 0, %s45
      %s48 = ssub.s32 %s35, %s47
      %s49 = ssub.s32 %s36, %s43
      %s50 = sor.u32 %s48, %s49
      %p51 = scmp.eq.s32.totalorder %s50, 0
      %s53 = sadd.s32 %s52, 1
      %s54 = scalar_select %p51, %s52, %s53
      %p57 = pneg %p51
      %p58 = scmp.eq.s32.totalorder %s28, 1
      %p59 = por %p57, %p58
      %p60 = scmp.ne.s32.totalorder %s52, %s55
      %p61 = scmp.eq.s32.totalorder %s28, 0
      %p62 = por %p60, %p61
      %p63 = scmp.ne.s32.totalorder %s52, %s55
      %p64 = scmp.eq.s32.totalorder %s33, 1
      %p65 = por %p63, %p64
      %p66 = scmp.ne.s32.totalorder %s55, %s56
      %p67 = scmp.eq.s32.totalorder %s33, 0
      %p68 = por %p66, %p67
      %p69 = scmp.ne.s32.totalorder %s55, %s56
      %p70 = scmp.eq.s32.totalorder %s34, 1
      %p71 = por %p69, %p70
      %p73 = scmp.ne.s32.totalorder %s56, %s72
      %p74 = scmp.eq.s32.totalorder %s34, 0
      %p75 = por %p73, %p74
      %s76 = ssub.s32 %s35, %s47
      %p77 = scmp.eq.s32.totalorder %s76, 0
      %s79 = sadd.s32 %s78, 1
      %s80 = scalar_select %p77, %s78, %s79
      %p83 = pneg %p77
      %p84 = scmp.eq.s32.totalorder %s28, 1
      %p85 = por %p83, %p84
      %p86 = scmp.ne.s32.totalorder %s78, %s81
      %p87 = scmp.eq.s32.totalorder %s28, 0
      %p88 = por %p86, %p87
      %p89 = scmp.ne.s32.totalorder %s78, %s81
      %p90 = scmp.eq.s32.totalorder %s33, 1
      %p91 = por %p89, %p90
      %p92 = scmp.ne.s32.totalorder %s81, %s82
      %p93 = scmp.eq.s32.totalorder %s33, 0
      %p94 = por %p92, %p93
      %p95 = scmp.ne.s32.totalorder %s81, %s82
      %p96 = scmp.eq.s32.totalorder %s34, 1
      %p97 = por %p95, %p96
      %p99 = scmp.ne.s32.totalorder %s82, %s98
      %p100 = scmp.eq.s32.totalorder %s34, 0
      %p101 = por %p99, %p100
      %s102 = ssub.s32 %s35, %s47
      %p103 = scmp.eq.s32.totalorder %s102, 0
      %s105 = sadd.s32 %s104, 1
      %s106 = scalar_select %p103, %s104, %s105
      %p109 = pneg %p103
      %p110 = scmp.eq.s32.totalorder %s28, 1
      %p111 = por %p109, %p110
      %p112 = scmp.ne.s32.totalorder %s104, %s107
      %p113 = scmp.eq.s32.totalorder %s28, 0
      %p114 = por %p112, %p113
      %p115 = scmp.ne.s32.totalorder %s104, %s107
      %p116 = scmp.eq.s32.totalorder %s33, 1
      %p117 = por %p115, %p116
      %p118 = scmp.ne.s32.totalorder %s107, %s108
      %p119 = scmp.eq.s32.totalorder %s33, 0
      %p120 = por %p118, %p119
      %p121 = scmp.ne.s32.totalorder %s107, %s108
      %p122 = scmp.eq.s32.totalorder %s34, 1
      %p123 = por %p121, %p122
      %p125 = scmp.ne.s32.totalorder %s108, %s124
      %p126 = scmp.eq.s32.totalorder %s34, 0
      %p127 = por %p125, %p126
      %s129 = sadd.s32 %s128, 1
      %p132 = scmp.eq.s32.totalorder %s28, 1
      %p133 = scmp.ne.s32.totalorder %s128, %s130
      %p134 = scmp.eq.s32.totalorder %s28, 0
      %p135 = por %p133, %p134
      %p136 = scmp.ne.s32.totalorder %s128, %s130
      %p137 = scmp.eq.s32.totalorder %s33, 1
      %p138 = por %p136, %p137
      %p139 = scmp.ne.s32.totalorder %s130, %s131
      %p140 = scmp.eq.s32.totalorder %s33, 0
      %p141 = por %p139, %p140
      %p142 = scmp.ne.s32.totalorder %s130, %s131
      %p143 = scmp.eq.s32.totalorder %s34, 1
      %p144 = por %p142, %p143
      %p146 = scmp.ne.s32.totalorder %s131, %s145
      %p147 = scmp.eq.s32.totalorder %s34, 0
      %p148 = por %p146, %p147
      %s150 = sadd.s32 %s149, 1
      %p153 = scmp.eq.s32.totalorder %s28, 1
      %p154 = scmp.ne.s32.totalorder %s149, %s151
      %p155 = scmp.eq.s32.totalorder %s28, 0
      %p156 = por %p154, %p155
      %p157 = scmp.ne.s32.totalorder %s149, %s151
      %p158 = scmp.eq.s32.totalorder %s33, 1
      %p159 = por %p157, %p158
      %p160 = scmp.ne.s32.totalorder %s151, %s152
      %p161 = scmp.eq.s32.totalorder %s33, 0
      %p162 = por %p160, %p161
      %p163 = scmp.ne.s32.totalorder %s151, %s152
      %p164 = scmp.eq.s32.totalorder %s34, 1
      %p165 = por %p163, %p164
      %p167 = scmp.ne.s32.totalorder %s152, %s166
      %p168 = scmp.eq.s32.totalorder %s34, 0
      %p169 = por %p167, %p168
      %s171 = sadd.s32 %s170, 1
      %p174 = scmp.eq.s32.totalorder %s28, 1
      %p175 = scmp.ne.s32.totalorder %s170, %s172
      %p176 = scmp.eq.s32.totalorder %s28, 0
      %p177 = por %p175, %p176
      %p178 = scmp.ne.s32.totalorder %s170, %s172
      %p179 = scmp.eq.s32.totalorder %s33, 1
      %p180 = por %p178, %p179
      %p181 = scmp.ne.s32.totalorder %s172, %s173
      %p182 = scmp.eq.s32.totalorder %s33, 0
      %p183 = por %p181, %p182
      %p184 = scmp.ne.s32.totalorder %s172, %s173
      %p185 = scmp.eq.s32.totalorder %s34, 1
      %p186 = por %p184, %p185
      %p188 = scmp.ne.s32.totalorder %s173, %s187
      %p189 = scmp.eq.s32.totalorder %s34, 0
      %p190 = por %p188, %p189
      %s192 = sadd.s32 %s191, 1
      %p195 = scmp.eq.s32.totalorder %s28, 1
      %p196 = scmp.ne.s32.totalorder %s191, %s193
      %p197 = scmp.eq.s32.totalorder %s28, 0
      %p198 = por %p196, %p197
      %p199 = scmp.ne.s32.totalorder %s191, %s193
      %p200 = scmp.eq.s32.totalorder %s33, 1
      %p201 = por %p199, %p200
      %p202 = scmp.ne.s32.totalorder %s193, %s194
      %p203 = scmp.eq.s32.totalorder %s33, 0
      %p204 = por %p202, %p203
      %p205 = scmp.ne.s32.totalorder %s193, %s194
      %p206 = scmp.eq.s32.totalorder %s34, 1
      %p207 = por %p205, %p206
      %p209 = scmp.ne.s32.totalorder %s194, %s208
      %p210 = scmp.eq.s32.totalorder %s34, 0
      %p211 = por %p209, %p210
      %s213 = sadd.s32 %s212, 1
      %p216 = scmp.eq.s32.totalorder %s28, 1
      %p217 = scmp.ne.s32.totalorder %s212, %s214
      %p218 = scmp.eq.s32.totalorder %s28, 0
      %p219 = por %p217, %p218
      %p220 = scmp.ne.s32.totalorder %s212, %s214
      %p221 = scmp.eq.s32.totalorder %s33, 1
      %p222 = por %p220, %p221
      %p223 = scmp.ne.s32.totalorder %s214, %s215
      %p224 = scmp.eq.s32.totalorder %s33, 0
      %p225 = por %p223, %p224
      %p226 = scmp.ne.s32.totalorder %s214, %s215
      %p227 = scmp.eq.s32.totalorder %s34, 1
      %p228 = por %p226, %p227
      %p230 = scmp.ne.s32.totalorder %s215, %s229
      %p231 = scmp.eq.s32.totalorder %s34, 0
      %p232 = por %p230, %p231
      %s234 = sadd.s32 %s233, 1
      %p237 = scmp.eq.s32.totalorder %s28, 1
      %p238 = scmp.ne.s32.totalorder %s233, %s235
      %p239 = scmp.eq.s32.totalorder %s28, 0
      %p240 = por %p238, %p239
      %p241 = scmp.ne.s32.totalorder %s233, %s235
      %p242 = scmp.eq.s32.totalorder %s33, 1
      %p243 = por %p241, %p242
      %p244 = scmp.ne.s32.totalorder %s235, %s236
      %p245 = scmp.eq.s32.totalorder %s33, 0
      %p246 = por %p244, %p245
      %p247 = scmp.ne.s32.totalorder %s235, %s236
      %p248 = scmp.eq.s32.totalorder %s34, 1
      %p249 = por %p247, %p248
      %p251 = scmp.ne.s32.totalorder %s236, %s250
      %p252 = scmp.eq.s32.totalorder %s34, 0
      %p253 = por %p251, %p252
      %s255 = sadd.s32 %s254, 1
      %p258 = scmp.eq.s32.totalorder %s28, 1
      %p259 = scmp.ne.s32.totalorder %s254, %s256
      %p260 = scmp.eq.s32.totalorder %s28, 0
      %p261 = por %p259, %p260
      %p262 = scmp.ne.s32.totalorder %s254, %s256
      %p263 = scmp.eq.s32.totalorder %s33, 1
      %p264 = por %p262, %p263
      %p265 = scmp.ne.s32.totalorder %s256, %s257
      %p266 = scmp.eq.s32.totalorder %s33, 0
      %p267 = por %p265, %p266
      %p268 = scmp.ne.s32.totalorder %s256, %s257
      %p269 = scmp.eq.s32.totalorder %s34, 1
      %p270 = por %p268, %p269
      %p272 = scmp.ne.s32.totalorder %s257, %s271
      %p273 = scmp.eq.s32.totalorder %s34, 0
      %p274 = por %p272, %p273
      %s276 = sadd.s32 %s275, 1
      %p279 = scmp.eq.s32.totalorder %s28, 1
      %p280 = scmp.ne.s32.totalorder %s275, %s277
      %p281 = scmp.eq.s32.totalorder %s28, 0
      %p282 = por %p280, %p281
      %p283 = scmp.ne.s32.totalorder %s275, %s277
      %p284 = scmp.eq.s32.totalorder %s33, 1
      %p285 = por %p283, %p284
      %p286 = scmp.ne.s32.totalorder %s277, %s278
      %p287 = scmp.eq.s32.totalorder %s33, 0
      %p288 = por %p286, %p287
      %p289 = scmp.ne.s32.totalorder %s277, %s278
      %p290 = scmp.eq.s32.totalorder %s34, 1
      %p291 = por %p289, %p290
      %p293 = scmp.ne.s32.totalorder %s278, %s292
      %p294 = scmp.eq.s32.totalorder %s34, 0
      %p295 = por %p293, %p294
      %s296 = ssub.s32 %s35, %s47
      %s297 = ssub.s32 %s36, %s43
      %s298 = sor.u32 %s296, %s297
      %p299 = scmp.eq.s32.totalorder %s298, 0
      %s301 = sadd.s32 %s300, 1
      %s302 = scalar_select %p299, %s300, %s301
      %p305 = pneg %p299
      %p306 = scmp.eq.s32.totalorder %s28, 1
      %p307 = por %p305, %p306
      %p308 = scmp.ne.s32.totalorder %s300, %s303
      %p309 = scmp.eq.s32.totalorder %s28, 0
      %p310 = por %p308, %p309
      %p311 = scmp.ne.s32.totalorder %s300, %s303
      %p312 = scmp.eq.s32.totalorder %s33, 1
      %p313 = por %p311, %p312
      %p314 = scmp.ne.s32.totalorder %s303, %s304
      %p315 = scmp.eq.s32.totalorder %s33, 0
      %p316 = por %p314, %p315
      %p317 = scmp.ne.s32.totalorder %s303, %s304
      %p318 = scmp.eq.s32.totalorder %s34, 1
      %p319 = por %p317, %p318
      %p321 = scmp.ne.s32.totalorder %s304, %s320
      %p322 = scmp.eq.s32.totalorder %s34, 0
      %p323 = por %p321, %p322
      %p324 = scmp.le.s32.totalorder 1, %s28
      %p325 = scmp.lt.s32.totalorder %s28, 3
      %p326 = pnand %p324, %p325
      %p327 = pneg %p326
      // Predicated region
      $region9: #{tpu_custom_call.1} parent=5 // pred_check
        _
      $region10: #{tpu_custom_call.1} parent=5 // pred_check_branch
        %329 = sbr.rel (%p326) target = $region12
      $region11: #{tpu_custom_call.1} parent=5 // pred_region
        %s330 = ssub.s32 %s28, 1
        // Predicated region
        $region13: #{tpu_custom_call.1} parent=11 // pred_check
          %p331 = pneg %p141
        $region14: #{tpu_custom_call.1} parent=11 // pred_check_branch
          %333 = sbr.rel (%p331) target = $region16
        $region15: #{tpu_custom_call.1} parent=11 // pred_region
          %s335 = ssub.s32 256, 256
          %336 = vsyncadd [#allocation12], %s335
          %s337 = sshll.u32 [#allocation11], 4
          %s338 = int_to_ptr.vmem [resolvable:$true] %s337
          %343 = dma.hbm_to_vmem [thread:$0]  %s3, 256, %s338, [#allocation12], 64, 64, 4
        $region16: #{tpu_custom_call.1} parent=11 // pred_fallthru
          _
        // Predicated region
        $region17: #{tpu_custom_call.1} parent=11 // pred_check
          %p344 = pneg %p162
        $region18: #{tpu_custom_call.1} parent=11 // pred_check_branch
          %346 = sbr.rel (%p344) target = $region20
        $region19: #{tpu_custom_call.1} parent=11 // pred_region
          _
        $region20: #{tpu_custom_call.1} parent=11 // pred_fallthru
          _
        // Predicated region
        $region21: #{tpu_custom_call.1} parent=11 // pred_check
          %p347 = pneg %p183
        $region22: #{tpu_custom_call.1} parent=11 // pred_check_branch
          %349 = sbr.rel (%p347) target = $region24
        $region23: #{tpu_custom_call.1} parent=11 // pred_region
          _
        $region24: #{tpu_custom_call.1} parent=11 // pred_fallthru
          _
        // Predicated region
        $region25: #{tpu_custom_call.1} parent=11 // pred_check
          %p350 = pneg %p204
        $region26: #{tpu_custom_call.1} parent=11 // pred_check_branch
          %352 = sbr.rel (%p350) target = $region28
        $region27: #{tpu_custom_call.1} parent=11 // pred_region
          _
        $region28: #{tpu_custom_call.1} parent=11 // pred_fallthru
          _
        // Predicated region
        $region29: #{tpu_custom_call.1} parent=11 // pred_check
          %p353 = pneg %p225
        $region30: #{tpu_custom_call.1} parent=11 // pred_check_branch
          %355 = sbr.rel (%p353) target = $region32
        $region31: #{tpu_custom_call.1} parent=11 // pred_region
          %s357 = ssub.s32 256, 256
          %358 = vsyncadd [#allocation12], %s357
          %s359 = sshll.u32 [#allocation13], 4
          %s360 = int_to_ptr.vmem [resolvable:$true] %s359
          %365 = dma.hbm_to_vmem [thread:$0]  %s7, 256, %s360, [#allocation12], 64, 64, 4
        $region32: #{tpu_custom_call.1} parent=11 // pred_fallthru
          _
        // Predicated region
        $region33: #{tpu_custom_call.1} parent=11 // pred_check
          %p366 = pneg %p246
        $region34: #{tpu_custom_call.1} parent=11 // pred_check_branch
          %368 = sbr.rel (%p366) target = $region36
        $region35: #{tpu_custom_call.1} parent=11 // pred_region
          %s370 = ssub.s32 16, 16
          %371 = vsyncadd [#allocation15], %s370
          %s373 = sshll.u32 [#allocation14], 4
          %s374 = int_to_ptr.vmem [resolvable:$true] %s373
          %376 = dma.hbm_to_vmem [thread:$0]  %s8, 16, %s374, [#allocation15]
        $region36: #{tpu_custom_call.1} parent=11 // pred_fallthru
          _
        // Predicated region
        $region37: #{tpu_custom_call.1} parent=11 // pred_check
          %p377 = pneg %p267
        $region38: #{tpu_custom_call.1} parent=11 // pred_check_branch
          %379 = sbr.rel (%p377) target = $region40
        $region39: #{tpu_custom_call.1} parent=11 // pred_region
          _
        $region40: #{tpu_custom_call.1} parent=11 // pred_fallthru
          _
        // Predicated region
        $region41: #{tpu_custom_call.1} parent=11 // pred_check
          %p380 = pneg %p288
        $region42: #{tpu_custom_call.1} parent=11 // pred_check_branch
          %382 = sbr.rel (%p380) target = $region44
        $region43: #{tpu_custom_call.1} parent=11 // pred_region
          _
        $region44: #{tpu_custom_call.1} parent=11 // pred_fallthru
          _
      $region12: #{tpu_custom_call.1} parent=5 // pred_fallthru
        _
      %p383 = scmp.lt.s32.totalorder %s28, 2
      // Predicated region
      $region45: #{tpu_custom_call.1} parent=5 // pred_check
        %p384 = pneg %p383
      $region46: #{tpu_custom_call.1} parent=5 // pred_check_branch
        %386 = sbr.rel (%p384) target = $region48
      $region47: #{tpu_custom_call.1} parent=5 // pred_region
        // Predicated region
        $region49: #{tpu_custom_call.1} parent=47 // pred_check
          %p387 = pneg %p62
        $region50: #{tpu_custom_call.1} parent=47 // pred_check_branch
          %389 = sbr.rel (%p387) target = $region52
        $region51: #{tpu_custom_call.1} parent=47 // pred_region
          %s390 = sand.u32 %s52, 1
          %s391 = scalar_lea.sflag [#allocation6], %s390
          %s392 = sand.u32 %s52, 1
          %s393 = smul.addr %s392, 8
          %s394 = scalar_lea.vmem [#allocation5], %s393
          %s396 = ssub.s32 128, 128
          %397 = vsyncadd %s391, %s396
          %s398 = sadd.s32 %s36, %s35
          %s399 = smul.addr %s398, 128
          %s400 = scalar_lea.hbm %s0, %s399
          %s402 = sshll.u32 %s394, 4
          %s403 = int_to_ptr.vmem [resolvable:$true] %s402
          %405 = dma.hbm_to_vmem [thread:$0]  %s400, 128, %s403, %s391
        $region52: #{tpu_custom_call.1} parent=47 // pred_fallthru
          _
        // Predicated region
        $region53: #{tpu_custom_call.1} parent=47 // pred_check
          %p406 = pneg %p88
        $region54: #{tpu_custom_call.1} parent=47 // pred_check_branch
          %408 = sbr.rel (%p406) target = $region56
        $region55: #{tpu_custom_call.1} parent=47 // pred_region
          %s409 = sand.u32 %s28, 1
          %s410 = scalar_lea.sflag [#allocation9], %s409
          %s411 = sand.u32 %s78, 1
          %s412 = smul.addr %s411, 8
          %s413 = scalar_lea.vmem [#allocation8], %s412
          %s415 = ssub.s32 128, 128
          %416 = vsyncadd %s410, %s415
          %s417 = smul.addr %s35, 128
          %s418 = scalar_lea.hbm %s1, %s417
          %s420 = sshll.u32 %s413, 4
          %s421 = int_to_ptr.vmem [resolvable:$true] %s420
          %423 = dma.hbm_to_vmem [thread:$0]  %s418, 128, %s421, %s410
        $region56: #{tpu_custom_call.1} parent=47 // pred_fallthru
          _
        // Predicated region
        $region57: #{tpu_custom_call.1} parent=47 // pred_check
          %p424 = pneg %p114
        $region58: #{tpu_custom_call.1} parent=47 // pred_check_branch
          %426 = sbr.rel (%p424) target = $region60
        $region59: #{tpu_custom_call.1} parent=47 // pred_region
          %s427 = sand.u32 %s28, 1
          %s428 = scalar_lea.sflag [#allocation9], %s427
          %s429 = sand.u32 %s104, 1
          %s430 = smul.addr %s429, 8
          %s431 = scalar_lea.vmem [#allocation10], %s430
          %s433 = ssub.s32 128, 128
          %434 = vsyncadd %s428, %s433
          %s435 = smul.addr %s35, 128
          %s436 = scalar_lea.hbm %s2, %s435
          %s438 = sshll.u32 %s431, 4
          %s439 = int_to_ptr.vmem [resolvable:$true] %s438
          %441 = dma.hbm_to_vmem [thread:$0]  %s436, 128, %s439, %s428
        $region60: #{tpu_custom_call.1} parent=47 // pred_fallthru
          _
      $region48: #{tpu_custom_call.1} parent=5 // pred_fallthru
        _
      %p442 = scmp.le.s32.totalorder 1, %s28
      %p443 = scmp.lt.s32.totalorder %s28, 3
      %p444 = pnand %p442, %p443
      %p445 = pneg %p444
      // Predicated region
      $region61: #{tpu_custom_call.1} parent=5 // pred_check
        _
      $region62: #{tpu_custom_call.1} parent=5 // pred_check_branch
        %447 = sbr.rel (%p444) target = $region64
      $region63: #{tpu_custom_call.1} parent=5 // pred_region
        %s448 = ssub.s32 %s28, 1
        %s449 = sand.u32 %s55, 1
        %s450 = scalar_lea.sflag [#allocation6], %s449
        %s451 = sand.u32 %s55, 1
        %s452 = smul.addr %s451, 8
        %s453 = scalar_lea.vmem [#allocation5], %s452
        // Predicated region
        $region65: #{tpu_custom_call.1} parent=63 // pred_check
          %p454 = pneg %p68
        $region66: #{tpu_custom_call.1} parent=63 // pred_check_branch
          %456 = sbr.rel (%p454) target = $region68
        $region67: #{tpu_custom_call.1} parent=63 // pred_region
          %457 = dma.done %s450, 128
        $region68: #{tpu_custom_call.1} parent=63 // pred_fallthru
          _
        %s458 = sand.u32 %s33, 1
        %s459 = scalar_lea.sflag [#allocation9], %s458
        %s460 = sand.u32 %s81, 1
        %s461 = smul.addr %s460, 8
        %s462 = scalar_lea.vmem [#allocation8], %s461
        // Predicated region
        $region69: #{tpu_custom_call.1} parent=63 // pred_check
          %p463 = pneg %p94
        $region70: #{tpu_custom_call.1} parent=63 // pred_check_branch
          %465 = sbr.rel (%p463) target = $region72
        $region71: #{tpu_custom_call.1} parent=63 // pred_region
          %466 = dma.done %s459, 128
        $region72: #{tpu_custom_call.1} parent=63 // pred_fallthru
          _
        %s467 = sand.u32 %s33, 1
        %s468 = scalar_lea.sflag [#allocation9], %s467
        %s469 = sand.u32 %s107, 1
        %s470 = smul.addr %s469, 8
        %s471 = scalar_lea.vmem [#allocation10], %s470
        // Predicated region
        $region73: #{tpu_custom_call.1} parent=63 // pred_check
          %p472 = pneg %p120
        $region74: #{tpu_custom_call.1} parent=63 // pred_check_branch
          %474 = sbr.rel (%p472) target = $region76
        $region75: #{tpu_custom_call.1} parent=63 // pred_region
          %475 = dma.done %s468, 128
        $region76: #{tpu_custom_call.1} parent=63 // pred_fallthru
          _
        // Predicated region
        $region77: #{tpu_custom_call.1} parent=63 // pred_check
          %p476 = pneg %p141
        $region78: #{tpu_custom_call.1} parent=63 // pred_check_branch
          %478 = sbr.rel (%p476) target = $region80
        $region79: #{tpu_custom_call.1} parent=63 // pred_region
          %479 = dma.done [#allocation12], 256
        $region80: #{tpu_custom_call.1} parent=63 // pred_fallthru
          _
        // Predicated region
        $region81: #{tpu_custom_call.1} parent=63 // pred_check
          %p480 = pneg %p225
        $region82: #{tpu_custom_call.1} parent=63 // pred_check_branch
          %482 = sbr.rel (%p480) target = $region84
        $region83: #{tpu_custom_call.1} parent=63 // pred_region
          %483 = dma.done [#allocation12], 256
        $region84: #{tpu_custom_call.1} parent=63 // pred_fallthru
          _
        // Predicated region
        $region85: #{tpu_custom_call.1} parent=63 // pred_check
          %p484 = pneg %p246
        $region86: #{tpu_custom_call.1} parent=63 // pred_check_branch
          %486 = sbr.rel (%p484) target = $region88
        $region87: #{tpu_custom_call.1} parent=63 // pred_region
          %487 = dma.done [#allocation15], 16
        $region88: #{tpu_custom_call.1} parent=63 // pred_fallthru
          _
        %s488 = sand.u32 %s55, 1
        %s489 = scalar_lea.sflag [#allocation6], %s488
        %s490 = sand.u32 %s55, 1
        %s491 = smul.addr %s490, 8
        %s492 = scalar_lea.vmem [#allocation5], %s491
        %p493 = pneg %p68
        %p494 = pneg %p65
        %s495 = sand.u32 %s33, 1
        %s496 = scalar_lea.sflag [#allocation9], %s495
        %s497 = sand.u32 %s81, 1
        %s498 = smul.addr %s497, 8
        %s499 = scalar_lea.vmem [#allocation8], %s498
        %p500 = pneg %p94
        %p501 = pneg %p91
        %s502 = sand.u32 %s33, 1
        %s503 = scalar_lea.sflag [#allocation9], %s502
        %s504 = sand.u32 %s107, 1
        %s505 = smul.addr %s504, 8
        %s506 = scalar_lea.vmem [#allocation10], %s505
        %p507 = pneg %p120
        %p508 = pneg %p117
        %p509 = pneg %p141
        %p510 = pneg %p138
        %p511 = pneg %p162
        %p512 = pneg %p159
        %p513 = pneg %p183
        %p514 = pneg %p180
        %p515 = pneg %p204
        %p516 = pneg %p201
        %p517 = pneg %p225
        %p518 = pneg %p222
        %p519 = pneg %p246
        %p520 = pneg %p243
        %p521 = pneg %p267
        %p522 = pneg %p264
        %p523 = pneg %p288
        %p524 = pneg %p285
        %p525 = pneg %p316
        %p526 = pneg %p313
        %s527 = sand.u32 %s303, 1
        %s528 = scalar_lea.sflag [#allocation7], %s527
        %s529 = sand.u32 %s303, 1
        %s530 = smul.addr %s529, 8
        %s531 = scalar_lea.vmem [#allocation16], %s530
        %p533 = scmp.eq.s32.totalorder %s38, 0
        // Predicated region
        $region89: #{tpu_custom_call.1} parent=63 // pred_check
          %p534 = pneg %p533
        $region90: #{tpu_custom_call.1} parent=63 // pred_check_branch
          %536 = sbr.rel (%p534) target = $region92
        $region91: #{tpu_custom_call.1} parent=63 // pred_region
          %v537 = vld [vmem:[%s462] sm:$0xff]
          %v538 = vpack.c.bf16 %v537, %v537
          %v539 = vld [vmem:[%s471] sm:$0xff]
          %v540 = vpack.c.bf16 %v539, %v539
          %v541 = vld [vmem:[%s5] sm:$0xf]
          %v542 = vld [vmem:[%s5 + $0x4] sm:$0xf]
          %v543 = vld [vmem:[%s5 + $0x8] sm:$0xf]
          %v544 = vld [vmem:[%s5 + $0xc] sm:$0xf]
          %v545 = vld [vmem:[%s6] sm:$0x1]
          %v547 = vlaneseq
          %v548 = vshrl.u32 %v547, 7
          %v549 = vsub.s32 0, %v548
          %v550 = vrot.slane %v545, %v549
          %v556 = vunpack.c.l.b16 %v541
          %v557 = vunpack.c.l.b16 %v542
          %v558 = vunpack.c.l.b16 %v543
          %v559 = vunpack.c.l.b16 %v544
          %v560 = vpack.c.b16 %v557, %v556
          %v561 = vpack.c.b16 %v559, %v558
          %vm564 = vcmask 261120
          %v566 = vsel %vm564, %v538, 0
          %568 = vmatprep.subr.bf16.mxu0 0
          %569 = vmatpush1.bf16.msra.mxu0 %v560
          %570 = vmatprep.subr.bf16.mxu0 0
          %571 = vmatpush1.bf16.msra.mxu0 %v561
          %572 = vmatprep.subr.bf16.mxu0 0
          %573 = vmatpush1.bf16.msra.mxu0 0
          %574 = vmatprep.subr.bf16.mxu0 0
          %575 = vmatpush1.bf16.msra.mxu0 0
          %576 = vmatprep.subr.bf16.mxu0 0
          %577 = vmatpush1.bf16.msra.mxu0 0
          %578 = vmatprep.subr.bf16.mxu0 0
          %579 = vmatpush1.bf16.msra.mxu0 0
          %580 = vmatprep.subr.bf16.mxu0 0
          %581 = vmatpush1.bf16.msra.mxu0 0
          %582 = vmatprep.subr.bf16.mxu0 0
          %583 = vmatpush1.bf16.msra.mxu0 0
          %584 = vmatprep.subr.bf16.mxu0 0
          %585 = vmatpush1.bf16.msra.mxu0 0
          %586 = vmatprep.subr.bf16.mxu0 0
          %587 = vmatpush1.bf16.msra.mxu0 0
          %588 = vmatprep.subr.bf16.mxu0 0
          %589 = vmatpush1.bf16.msra.mxu0 0
          %590 = vmatprep.subr.bf16.mxu0 0
          %591 = vmatpush1.bf16.msra.mxu0 0
          %592 = vmatprep.subr.bf16.mxu0 0
          %593 = vmatpush1.bf16.msra.mxu0 0
          %594 = vmatprep.subr.bf16.mxu0 0
          %595 = vmatpush1.bf16.msra.mxu0 0
          %596 = vmatprep.subr.bf16.mxu0 0
          %597 = vmatpush1.bf16.msra.mxu0 0
          %598 = vmatprep.subr.bf16.mxu0 0
          %599 = vmatpush1.bf16.msra.mxu0 0
          %600 = vmatprep.mubr.bf16.mxu0 0
          %601 = vmatmul.mubr.bf16.gmra.mrb[0].mxu0 %v566
          %v602 = vpop.f32.mrb[0].mxu0
          %v603 = vadd.f32 %v550, %v602
          %v604 = vpop.f32.mrb[0].mxu0
          %v605 = vpop.f32.mrb[0].mxu0
          %v606 = vpop.f32.mrb[0].mxu0
          %607 = vdwg.mxu0
          %v608 = vpack.c.bf16 %v603, %v603
          %vm609 = vcmask 257024
          %610 = vst.msk [vmem:[#allocation2] sm:$0xf] %vm609, %v608
          %v611 = vld [vmem:[#allocation13] sm:$0xf]
          %v612 = vld [vmem:[#allocation13 + $0x4] sm:$0xf]
          %v613 = vld [vmem:[#allocation13 + $0x8] sm:$0xf]
          %v614 = vld [vmem:[#allocation13 + $0xc] sm:$0xf]
          %v615 = vld [vmem:[#allocation14] sm:$0x1]
          %v617 = vlaneseq
          %v618 = vshrl.u32 %v617, 7
          %v619 = vsub.s32 0, %v618
          %v620 = vrot.slane %v615, %v619
          %v626 = vunpack.c.l.b16 %v611
          %v627 = vunpack.c.l.b16 %v612
          %v628 = vunpack.c.l.b16 %v613
          %v629 = vunpack.c.l.b16 %v614
          %v630 = vpack.c.b16 %v627, %v626
          %v631 = vpack.c.b16 %v629, %v628
          %v635 = vsel %vm564, %v540, 0
          %637 = vmatprep.subr.bf16.mxu0 0
          %638 = vmatpush1.bf16.msra.mxu0 %v630
          %639 = vmatprep.subr.bf16.mxu0 0
          %640 = vmatpush1.bf16.msra.mxu0 %v631
          %641 = vmatprep.subr.bf16.mxu0 0
          %642 = vmatpush1.bf16.msra.mxu0 0
          %643 = vmatprep.subr.bf16.mxu0 0
          %644 = vmatpush1.bf16.msra.mxu0 0
          %645 = vmatprep.subr.bf16.mxu0 0
          %646 = vmatpush1.bf16.msra.mxu0 0
          %647 = vmatprep.subr.bf16.mxu0 0
          %648 = vmatpush1.bf16.msra.mxu0 0
          %649 = vmatprep.subr.bf16.mxu0 0
          %650 = vmatpush1.bf16.msra.mxu0 0
          %651 = vmatprep.subr.bf16.mxu0 0
          %652 = vmatpush1.bf16.msra.mxu0 0
          %653 = vmatprep.subr.bf16.mxu0 0
          %654 = vmatpush1.bf16.msra.mxu0 0
          %655 = vmatprep.subr.bf16.mxu0 0
          %656 = vmatpush1.bf16.msra.mxu0 0
          %657 = vmatprep.subr.bf16.mxu0 0
          %658 = vmatpush1.bf16.msra.mxu0 0
          %659 = vmatprep.subr.bf16.mxu0 0
          %660 = vmatpush1.bf16.msra.mxu0 0
          %661 = vmatprep.subr.bf16.mxu0 0
          %662 = vmatpush1.bf16.msra.mxu0 0
          %663 = vmatprep.subr.bf16.mxu0 0
          %664 = vmatpush1.bf16.msra.mxu0 0
          %665 = vmatprep.subr.bf16.mxu0 0
          %666 = vmatpush1.bf16.msra.mxu0 0
          %667 = vmatprep.subr.bf16.mxu0 0
          %668 = vmatpush1.bf16.msra.mxu0 0
          %669 = vmatprep.mubr.bf16.mxu0 0
          %670 = vmatmul.mubr.bf16.gmra.mrb[0].mxu0 %v635
          %v671 = vpop.f32.mrb[0].mxu0
          %v672 = vadd.f32 %v620, %v671
          %v673 = vpop.f32.mrb[0].mxu0
          %v674 = vpop.f32.mrb[0].mxu0
          %v675 = vpop.f32.mrb[0].mxu0
          %676 = vdwg.mxu0
          %v677 = vpack.c.bf16 %v672, %v672
          %678 = vst.msk [vmem:[#allocation3] sm:$0xf] %vm609, %v677
        $region92: #{tpu_custom_call.1} parent=63 // pred_fallthru
          _
        %v679 = vld [vmem:[%s453] sm:$0xff]
        %v680 = vpack.c.bf16 %v679, %v679
        %v681 = vld [vmem:[#allocation11] sm:$0xf]
        %v682 = vld [vmem:[#allocation11 + $0x4] sm:$0xf]
        %v683 = vld [vmem:[#allocation11 + $0x8] sm:$0xf]
        %v684 = vld [vmem:[#allocation11 + $0xc] sm:$0xf]
        %v685 = vld [vmem:[%s4] sm:$0x1]
        %v687 = vlaneseq
        %v688 = vshrl.u32 %v687, 7
        %v689 = vsub.s32 0, %v688
        %v690 = vrot.slane %v685, %v689
        %v696 = vunpack.c.l.b16 %v681
        %v697 = vunpack.c.l.b16 %v682
        %v698 = vunpack.c.l.b16 %v683
        %v699 = vunpack.c.l.b16 %v684
        %v700 = vpack.c.b16 %v697, %v696
        %v701 = vpack.c.b16 %v699, %v698
        %vm704 = vcmask 261120
        %v706 = vsel %vm704, %v680, 0
        %708 = vmatprep.subr.bf16.mxu0 0
        %709 = vmatpush1.bf16.msra.mxu0 %v700
        %710 = vmatprep.subr.bf16.mxu0 0
        %711 = vmatpush1.bf16.msra.mxu0 %v701
        %712 = vmatprep.subr.bf16.mxu0 0
        %713 = vmatpush1.bf16.msra.mxu0 0
        %714 = vmatprep.subr.bf16.mxu0 0
        %715 = vmatpush1.bf16.msra.mxu0 0
        %716 = vmatprep.subr.bf16.mxu0 0
        %717 = vmatpush1.bf16.msra.mxu0 0
        %718 = vmatprep.subr.bf16.mxu0 0
        %719 = vmatpush1.bf16.msra.mxu0 0
        %720 = vmatprep.subr.bf16.mxu0 0
        %721 = vmatpush1.bf16.msra.mxu0 0
        %722 = vmatprep.subr.bf16.mxu0 0
        %723 = vmatpush1.bf16.msra.mxu0 0
        %724 = vmatprep.subr.bf16.mxu0 0
        %725 = vmatpush1.bf16.msra.mxu0 0
        %726 = vmatprep.subr.bf16.mxu0 0
        %727 = vmatpush1.bf16.msra.mxu0 0
        %728 = vmatprep.subr.bf16.mxu0 0
        %729 = vmatpush1.bf16.msra.mxu0 0
        %730 = vmatprep.subr.bf16.mxu0 0
        %731 = vmatpush1.bf16.msra.mxu0 0
        %732 = vmatprep.subr.bf16.mxu0 0
        %733 = vmatpush1.bf16.msra.mxu0 0
        %734 = vmatprep.subr.bf16.mxu0 0
        %735 = vmatpush1.bf16.msra.mxu0 0
        %736 = vmatprep.subr.bf16.mxu0 0
        %737 = vmatpush1.bf16.msra.mxu0 0
        %738 = vmatprep.subr.bf16.mxu0 0
        %739 = vmatpush1.bf16.msra.mxu0 0
        %740 = vmatprep.mubr.bf16.mxu0 0
        %741 = vmatmul.mubr.bf16.gmra.mrb[0].mxu0 %v706
        %v742 = vpop.f32.mrb[0].mxu0
        %v743 = vadd.f32 %v690, %v742
        %v744 = vpop.f32.mrb[0].mxu0
        %v745 = vpop.f32.mrb[0].mxu0
        %v746 = vpop.f32.mrb[0].mxu0
        %747 = vdwg.mxu0
        %v748 = vmul.f32 %v743, 0.35355338
        %v749 = vpack.c.bf16 %v748, %v748
        %v750 = vld [vmem:[#allocation2] sm:$0xf]
        %v751 = vld [vmem:[#allocation3] sm:$0xf]
        %vm752 = vcmask 64512
        %v754 = vsel %vm752, %v749, 0
        %v757 = vsel %vm752, %v750, 0
        %759 = vmatprep.subr.bf16.mxu0 0
        %760 = vmatpush1.bf16.xpose.msra.mxu0 %v757
        %761 = vmatprep.subr.bf16.mxu0 0
        %762 = vmatpush1.bf16.xpose.msra.mxu0 0
        %763 = vmatprep.subr.bf16.mxu0 0
        %764 = vmatpush1.bf16.xpose.msra.mxu0 0
        %765 = vmatprep.subr.bf16.mxu0 0
        %766 = vmatpush1.bf16.xpose.msra.mxu0 0
        %767 = vmatprep.subr.bf16.mxu0 0
        %768 = vmatpush1.bf16.xpose.msra.mxu0 0
        %769 = vmatprep.subr.bf16.mxu0 0
        %770 = vmatpush1.bf16.xpose.msra.mxu0 0
        %771 = vmatprep.subr.bf16.mxu0 0
        %772 = vmatpush1.bf16.xpose.msra.mxu0 0
        %773 = vmatprep.subr.bf16.mxu0 0
        %774 = vmatpush1.bf16.xpose.msra.mxu0 0
        %775 = vmatprep.subr.bf16.mxu0 0
        %776 = vmatpush1.bf16.xpose.msra.mxu0 0
        %777 = vmatprep.subr.bf16.mxu0 0
        %778 = vmatpush1.bf16.xpose.msra.mxu0 0
        %779 = vmatprep.subr.bf16.mxu0 0
        %780 = vmatpush1.bf16.xpose.msra.mxu0 0
        %781 = vmatprep.subr.bf16.mxu0 0
        %782 = vmatpush1.bf16.xpose.msra.mxu0 0
        %783 = vmatprep.subr.bf16.mxu0 0
        %784 = vmatpush1.bf16.xpose.msra.mxu0 0
        %785 = vmatprep.subr.bf16.mxu0 0
        %786 = vmatpush1.bf16.xpose.msra.mxu0 0
        %787 = vmatprep.subr.bf16.mxu0 0
        %788 = vmatpush1.bf16.xpose.msra.mxu0 0
        %789 = vmatprep.subr.bf16.mxu0 0
        %790 = vmatpush1.bf16.xpose.msra.mxu0 0
        %791 = vmatprep.mubr.bf16.mxu0 0
        %792 = vmatmul.mubr.bf16.gmra.mrb[0].mxu0 %v754
        %v793 = vpop.f32.mrb[0].mxu0
        %v794 = vadd.f32 0.0, %v793
        %v795 = vpop.f32.mrb[0].mxu0
        %v796 = vpop.f32.mrb[0].mxu0
        %v797 = vpop.f32.mrb[0].mxu0
        %798 = vdwg.mxu0
        %v799 = vsel %vm752, %v794, -inf
        %800 = vmax.xlane.f32.xlu0 %v799
        %v801 = vpop.xlane.xlu0 %800
        %v802 = vsub.f32 %v794, %v801
        %v803 = vmul.f32 %v802, 1.442695
        %v804 = vpow.pop %v803
        %v805 = vsel %vm752, %v804, 0.0
        %806 = vadd.xlane.f32.xlu0 %v805
        %v807 = vpop.xlane.xlu0 %806
        %v808 = vpack.c.bf16 %v804, %v804
        %v810 = vsel %vm752, %v808, 0
        %vm812 = vcmask 1043456
        %v814 = vsel %vm812, %v751, 0
        %816 = vmatprep.subr.bf16.mxu0 0
        %817 = vmatpush1.bf16.msra.mxu0 %v814
        %818 = vmatprep.subr.bf16.mxu0 0
        %819 = vmatpush1.bf16.msra.mxu0 0
        %820 = vmatprep.subr.bf16.mxu0 0
        %821 = vmatpush1.bf16.msra.mxu0 0
        %822 = vmatprep.subr.bf16.mxu0 0
        %823 = vmatpush1.bf16.msra.mxu0 0
        %824 = vmatprep.subr.bf16.mxu0 0
        %825 = vmatpush1.bf16.msra.mxu0 0
        %826 = vmatprep.subr.bf16.mxu0 0
        %827 = vmatpush1.bf16.msra.mxu0 0
        %828 = vmatprep.subr.bf16.mxu0 0
        %829 = vmatpush1.bf16.msra.mxu0 0
        %830 = vmatprep.subr.bf16.mxu0 0
        %831 = vmatpush1.bf16.msra.mxu0 0
        %832 = vmatprep.subr.bf16.mxu0 0
        %833 = vmatpush1.bf16.msra.mxu0 0
        %834 = vmatprep.subr.bf16.mxu0 0
        %835 = vmatpush1.bf16.msra.mxu0 0
        %836 = vmatprep.subr.bf16.mxu0 0
        %837 = vmatpush1.bf16.msra.mxu0 0
        %838 = vmatprep.subr.bf16.mxu0 0
        %839 = vmatpush1.bf16.msra.mxu0 0
        %840 = vmatprep.subr.bf16.mxu0 0
        %841 = vmatpush1.bf16.msra.mxu0 0
        %842 = vmatprep.subr.bf16.mxu0 0
        %843 = vmatpush1.bf16.msra.mxu0 0
        %844 = vmatprep.subr.bf16.mxu0 0
        %845 = vmatpush1.bf16.msra.mxu0 0
        %846 = vmatprep.subr.bf16.mxu0 0
        %847 = vmatpush1.bf16.msra.mxu0 0
        %848 = vmatprep.mubr.bf16.mxu0 0
        %849 = vmatmul.mubr.bf16.gmra.mrb[0].mxu0 %v810
        %v850 = vpop.f32.mrb[0].mxu0
        %v851 = vadd.f32 0.0, %v850
        %v852 = vpop.f32.mrb[0].mxu0
        %v853 = vpop.f32.mrb[0].mxu0
        %v854 = vpop.f32.mrb[0].mxu0
        %855 = vdwg.mxu0
        %v856 = vrcp.pop %v807
        %v857 = vmul.f32 %v851, %v856
        %v858 = vpack.c.bf16 %v857, %v857
        %vm859 = vcmask 60416
        %860 = vst.msk [vmem:[#allocation4] sm:$0xf] %vm859, %v858
        %862 = vrot.lane.b32.xlu0 %v749, 120
        %v863 = vpop.permute.xlu0 %862
        %v865 = vunpack.c.l.b16 %v750
        %v866 = vpack.c.b16 %v865, %v865
        %867 = vrot.lane.b32.xlu0 %v866, 120
        %v868 = vpop.permute.xlu0 %867
        %v870 = vsel %vm752, %v863, 0
        %v873 = vsel %vm752, %v868, 0
        %875 = vmatprep.subr.bf16.mxu0 0
        %876 = vmatpush1.bf16.xpose.msra.mxu0 %v873
        %877 = vmatprep.subr.bf16.mxu0 0
        %878 = vmatpush1.bf16.xpose.msra.mxu0 0
        %879 = vmatprep.subr.bf16.mxu0 0
        %880 = vmatpush1.bf16.xpose.msra.mxu0 0
        %881 = vmatprep.subr.bf16.mxu0 0
        %882 = vmatpush1.bf16.xpose.msra.mxu0 0
        %883 = vmatprep.subr.bf16.mxu0 0
        %884 = vmatpush1.bf16.xpose.msra.mxu0 0
        %885 = vmatprep.subr.bf16.mxu0 0
        %886 = vmatpush1.bf16.xpose.msra.mxu0 0
        %887 = vmatprep.subr.bf16.mxu0 0
        %888 = vmatpush1.bf16.xpose.msra.mxu0 0
        %889 = vmatprep.subr.bf16.mxu0 0
        %890 = vmatpush1.bf16.xpose.msra.mxu0 0
        %891 = vmatprep.subr.bf16.mxu0 0
        %892 = vmatpush1.bf16.xpose.msra.mxu0 0
        %893 = vmatprep.subr.bf16.mxu0 0
        %894 = vmatpush1.bf16.xpose.msra.mxu0 0
        %895 = vmatprep.subr.bf16.mxu0 0
        %896 = vmatpush1.bf16.xpose.msra.mxu0 0
        %897 = vmatprep.subr.bf16.mxu0 0
        %898 = vmatpush1.bf16.xpose.msra.mxu0 0
        %899 = vmatprep.subr.bf16.mxu0 0
        %900 = vmatpush1.bf16.xpose.msra.mxu0 0
        %901 = vmatprep.subr.bf16.mxu0 0
        %902 = vmatpush1.bf16.xpose.msra.mxu0 0
        %903 = vmatprep.subr.bf16.mxu0 0
        %904 = vmatpush1.bf16.xpose.msra.mxu0 0
        %905 = vmatprep.subr.bf16.mxu0 0
        %906 = vmatpush1.bf16.xpose.msra.mxu0 0
        %907 = vmatprep.mubr.bf16.mxu0 0
        %908 = vmatmul.mubr.bf16.gmra.mrb[0].mxu0 %v870
        %v909 = vpop.f32.mrb[0].mxu0
        %v910 = vadd.f32 0.0, %v909
        %v911 = vpop.f32.mrb[0].mxu0
        %v912 = vpop.f32.mrb[0].mxu0
        %v913 = vpop.f32.mrb[0].mxu0
        %914 = vdwg.mxu0
        %v915 = vsel %vm752, %v910, -inf
        %916 = vmax.xlane.f32.xlu0 %v915
        %v917 = vpop.xlane.xlu0 %916
        %v918 = vsub.f32 %v910, %v917
        %v919 = vmul.f32 %v918, 1.442695
        %v920 = vpow.pop %v919
        %v921 = vsel %vm752, %v920, 0.0
        %922 = vadd.xlane.f32.xlu0 %v921
        %v923 = vpop.xlane.xlu0 %922
        %v924 = vpack.c.bf16 %v920, %v920
        %v926 = vunpack.c.l.b16 %v751
        %v927 = vpack.c.b16 %v926, %v926
        %928 = vrot.lane.b32.xlu0 %v927, 120
        %v929 = vpop.permute.xlu0 %928
        %v931 = vsel %vm752, %v924, 0
        %v934 = vsel %vm812, %v929, 0
        %936 = vmatprep.subr.bf16.mxu0 0
        %937 = vmatpush1.bf16.msra.mxu0 %v934
        %938 = vmatprep.subr.bf16.mxu0 0
        %939 = vmatpush1.bf16.msra.mxu0 0
        %940 = vmatprep.subr.bf16.mxu0 0
        %941 = vmatpush1.bf16.msra.mxu0 0
        %942 = vmatprep.subr.bf16.mxu0 0
        %943 = vmatpush1.bf16.msra.mxu0 0
        %944 = vmatprep.subr.bf16.mxu0 0
        %945 = vmatpush1.bf16.msra.mxu0 0
        %946 = vmatprep.subr.bf16.mxu0 0
        %947 = vmatpush1.bf16.msra.mxu0 0
        %948 = vmatprep.subr.bf16.mxu0 0
        %949 = vmatpush1.bf16.msra.mxu0 0
        %950 = vmatprep.subr.bf16.mxu0 0
        %951 = vmatpush1.bf16.msra.mxu0 0
        %952 = vmatprep.subr.bf16.mxu0 0
        %953 = vmatpush1.bf16.msra.mxu0 0
        %954 = vmatprep.subr.bf16.mxu0 0
        %955 = vmatpush1.bf16.msra.mxu0 0
        %956 = vmatprep.subr.bf16.mxu0 0
        %957 = vmatpush1.bf16.msra.mxu0 0
        %958 = vmatprep.subr.bf16.mxu0 0
        %959 = vmatpush1.bf16.msra.mxu0 0
        %960 = vmatprep.subr.bf16.mxu0 0
        %961 = vmatpush1.bf16.msra.mxu0 0
        %962 = vmatprep.subr.bf16.mxu0 0
        %963 = vmatpush1.bf16.msra.mxu0 0
        %964 = vmatprep.subr.bf16.mxu0 0
        %965 = vmatpush1.bf16.msra.mxu0 0
        %966 = vmatprep.subr.bf16.mxu0 0
        %967 = vmatpush1.bf16.msra.mxu0 0
        %968 = vmatprep.mubr.bf16.mxu0 0
        %969 = vmatmul.mubr.bf16.gmra.mrb[0].mxu0 %v931
        %v970 = vpop.f32.mrb[0].mxu0
        %v971 = vadd.f32 0.0, %v970
        %v972 = vpop.f32.mrb[0].mxu0
        %v973 = vpop.f32.mrb[0].mxu0
        %v974 = vpop.f32.mrb[0].mxu0
        %975 = vdwg.mxu0
        %v976 = vrcp.pop %v923
        %v977 = vmul.f32 %v971, %v976
        %v978 = vpack.c.bf16 %v977, %v977
        %v980 = vunpack.c.l.b16 %v978
        %v981 = vpack.c.b16 %v980, %v980
        %982 = vrot.lane.b32.xlu0 %v981, 8
        %v983 = vpop.permute.xlu0 %982
        %vm985 = vcmask 126016
        %986 = vst.msk [vmem:[#allocation4] sm:$0xf] %vm985, %v983
        %987 = vrot.lane.b32.xlu0 %v749, 112
        %v988 = vpop.permute.xlu0 %987
        %989 = vrot.lane.b32.xlu0 %v866, 112
        %v990 = vpop.permute.xlu0 %989
        %v992 = vsel %vm752, %v988, 0
        %v995 = vsel %vm752, %v990, 0
        %997 = vmatprep.subr.bf16.mxu0 0
        %998 = vmatpush1.bf16.xpose.msra.mxu0 %v995
        %999 = vmatprep.subr.bf16.mxu0 0
        %1000 = vmatpush1.bf16.xpose.msra.mxu0 0
        %1001 = vmatprep.subr.bf16.mxu0 0
        %1002 = vmatpush1.bf16.xpose.msra.mxu0 0
        %1003 = vmatprep.subr.bf16.mxu0 0
        %1004 = vmatpush1.bf16.xpose.msra.mxu0 0
        %1005 = vmatprep.subr.bf16.mxu0 0
        %1006 = vmatpush1.bf16.xpose.msra.mxu0 0
        %1007 = vmatprep.subr.bf16.mxu0 0
        %1008 = vmatpush1.bf16.xpose.msra.mxu0 0
        %1009 = vmatprep.subr.bf16.mxu0 0
        %1010 = vmatpush1.bf16.xpose.msra.mxu0 0
        %1011 = vmatprep.subr.bf16.mxu0 0
        %1012 = vmatpush1.bf16.xpose.msra.mxu0 0
        %1013 = vmatprep.subr.bf16.mxu0 0
        %1014 = vmatpush1.bf16.xpose.msra.mxu0 0
        %1015 = vmatprep.subr.bf16.mxu0 0
        %1016 = vmatpush1.bf16.xpose.msra.mxu0 0
        %1017 = vmatprep.subr.bf16.mxu0 0
        %1018 = vmatpush1.bf16.xpose.msra.mxu0 0
        %1019 = vmatprep.subr.bf16.mxu0 0
        %1020 = vmatpush1.bf16.xpose.msra.mxu0 0
        %1021 = vmatprep.subr.bf16.mxu0 0
        %1022 = vmatpush1.bf16.xpose.msra.mxu0 0
        %1023 = vmatprep.subr.bf16.mxu0 0
        %1024 = vmatpush1.bf16.xpose.msra.mxu0 0
        %1025 = vmatprep.subr.bf16.mxu0 0
        %1026 = vmatpush1.bf16.xpose.msra.mxu0 0
        %1027 = vmatprep.subr.bf16.mxu0 0
        %1028 = vmatpush1.bf16.xpose.msra.mxu0 0
        %1029 = vmatprep.mubr.bf16.mxu0 0
        %1030 = vmatmul.mubr.bf16.gmra.mrb[0].mxu0 %v992
        %v1031 = vpop.f32.mrb[0].mxu0
        %v1032 = vadd.f32 0.0, %v1031
        %v1033 = vpop.f32.mrb[0].mxu0
        %v1034 = vpop.f32.mrb[0].mxu0
        %v1035 = vpop.f32.mrb[0].mxu0
        %1036 = vdwg.mxu0
        %v1037 = vsel %vm752, %v1032, -inf
        %1038 = vmax.xlane.f32.xlu0 %v1037
        %v1039 = vpop.xlane.xlu0 %1038
        %v1040 = vsub.f32 %v1032, %v1039
        %v1041 = vmul.f32 %v1040, 1.442695
        %v1042 = vpow.pop %v1041
        %v1043 = vsel %vm752, %v1042, 0.0
        %1044 = vadd.xlane.f32.xlu0 %v1043
        %v1045 = vpop.xlane.xlu0 %1044
        %v1046 = vpack.c.bf16 %v1042, %v1042
        %1047 = vrot.lane.b32.xlu0 %v927, 112
        %v1048 = vpop.permute.xlu0 %1047
        %v1050 = vsel %vm752, %v1046, 0
        %v1053 = vsel %vm812, %v1048, 0
        %1055 = vmatprep.subr.bf16.mxu0 0
        %1056 = vmatpush1.bf16.msra.mxu0 %v1053
        %1057 = vmatprep.subr.bf16.mxu0 0
        %1058 = vmatpush1.bf16.msra.mxu0 0
        %1059 = vmatprep.subr.bf16.mxu0 0
        %1060 = vmatpush1.bf16.msra.mxu0 0
        %1061 = vmatprep.subr.bf16.mxu0 0
        %1062 = vmatpush1.bf16.msra.mxu0 0
        %1063 = vmatprep.subr.bf16.mxu0 0
        %1064 = vmatpush1.bf16.msra.mxu0 0
        %1065 = vmatprep.subr.bf16.mxu0 0
        %1066 = vmatpush1.bf16.msra.mxu0 0
        %1067 = vmatprep.subr.bf16.mxu0 0
        %1068 = vmatpush1.bf16.msra.mxu0 0
        %1069 = vmatprep.subr.bf16.mxu0 0
        %1070 = vmatpush1.bf16.msra.mxu0 0
        %1071 = vmatprep.subr.bf16.mxu0 0
        %1072 = vmatpush1.bf16.msra.mxu0 0
        %1073 = vmatprep.subr.bf16.mxu0 0
        %1074 = vmatpush1.bf16.msra.mxu0 0
        %1075 = vmatprep.subr.bf16.mxu0 0
        %1076 = vmatpush1.bf16.msra.mxu0 0
        %1077 = vmatprep.subr.bf16.mxu0 0
        %1078 = vmatpush1.bf16.msra.mxu0 0
        %1079 = vmatprep.subr.bf16.mxu0 0
        %1080 = vmatpush1.bf16.msra.mxu0 0
        %1081 = vmatprep.subr.bf16.mxu0 0
        %1082 = vmatpush1.bf16.msra.mxu0 0
        %1083 = vmatprep.subr.bf16.mxu0 0
        %1084 = vmatpush1.bf16.msra.mxu0 0
        %1085 = vmatprep.subr.bf16.mxu0 0
        %1086 = vmatpush1.bf16.msra.mxu0 0
        %1087 = vmatprep.mubr.bf16.mxu0 0
        %1088 = vmatmul.mubr.bf16.gmra.mrb[0].mxu0 %v1050
        %v1089 = vpop.f32.mrb[0].mxu0
        %v1090 = vadd.f32 0.0, %v1089
        %v1091 = vpop.f32.mrb[0].mxu0
        %v1092 = vpop.f32.mrb[0].mxu0
        %v1093 = vpop.f32.mrb[0].mxu0
        %1094 = vdwg.mxu0
        %v1095 = vrcp.pop %v1045
        %v1096 = vmul.f32 %v1090, %v1095
        %v1097 = vpack.c.bf16 %v1096, %v1096
        %v1099 = vunpack.c.l.b16 %v1097
        %v1100 = vpack.c.b16 %v1099, %v1099
        %1101 = vrot.lane.b32.xlu0 %v1100, 16
        %v1102 = vpop.permute.xlu0 %1101
        %vm1104 = vcmask 191616
        %1105 = vst.msk [vmem:[#allocation4] sm:$0xf] %vm1104, %v1102
        %1106 = vrot.lane.b32.xlu0 %v749, 104
        %v1107 = vpop.permute.xlu0 %1106
        %1108 = vrot.lane.b32.xlu0 %v866, 104
        %v1109 = vpop.permute.xlu0 %1108
        %v1111 = vsel %vm752, %v1107, 0
        %v1114 = vsel %vm752, %v1109, 0
        %1116 = vmatprep.subr.bf16.mxu0 0
        %1117 = vmatpush1.bf16.xpose.msra.mxu0 %v1114
        %1118 = vmatprep.subr.bf16.mxu0 0
        %1119 = vmatpush1.bf16.xpose.msra.mxu0 0
        %1120 = vmatprep.subr.bf16.mxu0 0
        %1121 = vmatpush1.bf16.xpose.msra.mxu0 0
        %1122 = vmatprep.subr.bf16.mxu0 0
        %1123 = vmatpush1.bf16.xpose.msra.mxu0 0
        %1124 = vmatprep.subr.bf16.mxu0 0
        %1125 = vmatpush1.bf16.xpose.msra.mxu0 0
        %1126 = vmatprep.subr.bf16.mxu0 0
        %1127 = vmatpush1.bf16.xpose.msra.mxu0 0
        %1128 = vmatprep.subr.bf16.mxu0 0
        %1129 = vmatpush1.bf16.xpose.msra.mxu0 0
        %1130 = vmatprep.subr.bf16.mxu0 0
        %1131 = vmatpush1.bf16.xpose.msra.mxu0 0
        %1132 = vmatprep.subr.bf16.mxu0 0
        %1133 = vmatpush1.bf16.xpose.msra.mxu0 0
        %1134 = vmatprep.subr.bf16.mxu0 0
        %1135 = vmatpush1.bf16.xpose.msra.mxu0 0
        %1136 = vmatprep.subr.bf16.mxu0 0
        %1137 = vmatpush1.bf16.xpose.msra.mxu0 0
        %1138 = vmatprep.subr.bf16.mxu0 0
        %1139 = vmatpush1.bf16.xpose.msra.mxu0 0
        %1140 = vmatprep.subr.bf16.mxu0 0
        %1141 = vmatpush1.bf16.xpose.msra.mxu0 0
        %1142 = vmatprep.subr.bf16.mxu0 0
        %1143 = vmatpush1.bf16.xpose.msra.mxu0 0
        %1144 = vmatprep.subr.bf16.mxu0 0
        %1145 = vmatpush1.bf16.xpose.msra.mxu0 0
        %1146 = vmatprep.subr.bf16.mxu0 0
        %1147 = vmatpush1.bf16.xpose.msra.mxu0 0
        %1148 = vmatprep.mubr.bf16.mxu0 0
        %1149 = vmatmul.mubr.bf16.gmra.mrb[0].mxu0 %v1111
        %v1150 = vpop.f32.mrb[0].mxu0
        %v1151 = vadd.f32 0.0, %v1150
        %v1152 = vpop.f32.mrb[0].mxu0
        %v1153 = vpop.f32.mrb[0].mxu0
        %v1154 = vpop.f32.mrb[0].mxu0
        %1155 = vdwg.mxu0
        %v1156 = vsel %vm752, %v1151, -inf
        %1157 = vmax.xlane.f32.xlu0 %v1156
        %v1158 = vpop.xlane.xlu0 %1157
        %v1159 = vsub.f32 %v1151, %v1158
        %v1160 = vmul.f32 %v1159, 1.442695
        %v1161 = vpow.pop %v1160
        %v1162 = vsel %vm752, %v1161, 0.0
        %1163 = vadd.xlane.f32.xlu0 %v1162
        %v1164 = vpop.xlane.xlu0 %1163
        %v1165 = vpack.c.bf16 %v1161, %v1161
        %1166 = vrot.lane.b32.xlu0 %v927, 104
        %v1167 = vpop.permute.xlu0 %1166
        %v1169 = vsel %vm752, %v1165, 0
        %v1172 = vsel %vm812, %v1167, 0
        %1174 = vmatprep.subr.bf16.mxu0 0
        %1175 = vmatpush1.bf16.msra.mxu0 %v1172
        %1176 = vmatprep.subr.bf16.mxu0 0
        %1177 = vmatpush1.bf16.msra.mxu0 0
        %1178 = vmatprep.subr.bf16.mxu0 0
        %1179 = vmatpush1.bf16.msra.mxu0 0
        %1180 = vmatprep.subr.bf16.mxu0 0
        %1181 = vmatpush1.bf16.msra.mxu0 0
        %1182 = vmatprep.subr.bf16.mxu0 0
        %1183 = vmatpush1.bf16.msra.mxu0 0
        %1184 = vmatprep.subr.bf16.mxu0 0
        %1185 = vmatpush1.bf16.msra.mxu0 0
        %1186 = vmatprep.subr.bf16.mxu0 0
        %1187 = vmatpush1.bf16.msra.mxu0 0
        %1188 = vmatprep.subr.bf16.mxu0 0
        %1189 = vmatpush1.bf16.msra.mxu0 0
        %1190 = vmatprep.subr.bf16.mxu0 0
        %1191 = vmatpush1.bf16.msra.mxu0 0
        %1192 = vmatprep.subr.bf16.mxu0 0
        %1193 = vmatpush1.bf16.msra.mxu0 0
        %1194 = vmatprep.subr.bf16.mxu0 0
        %1195 = vmatpush1.bf16.msra.mxu0 0
        %1196 = vmatprep.subr.bf16.mxu0 0
        %1197 = vmatpush1.bf16.msra.mxu0 0
        %1198 = vmatprep.subr.bf16.mxu0 0
        %1199 = vmatpush1.bf16.msra.mxu0 0
        %1200 = vmatprep.subr.bf16.mxu0 0
        %1201 = vmatpush1.bf16.msra.mxu0 0
        %1202 = vmatprep.subr.bf16.mxu0 0
        %1203 = vmatpush1.bf16.msra.mxu0 0
        %1204 = vmatprep.subr.bf16.mxu0 0
        %1205 = vmatpush1.bf16.msra.mxu0 0
        %1206 = vmatprep.mubr.bf16.mxu0 0
        %1207 = vmatmul.mubr.bf16.gmra.mrb[0].mxu0 %v1169
        %v1208 = vpop.f32.mrb[0].mxu0
        %v1209 = vadd.f32 0.0, %v1208
        %v1210 = vpop.f32.mrb[0].mxu0
        %v1211 = vpop.f32.mrb[0].mxu0
        %v1212 = vpop.f32.mrb[0].mxu0
        %1213 = vdwg.mxu0
        %v1214 = vrcp.pop %v1164
        %v1215 = vmul.f32 %v1209, %v1214
        %v1216 = vpack.c.bf16 %v1215, %v1215
        %v1218 = vunpack.c.l.b16 %v1216
        %v1219 = vpack.c.b16 %v1218, %v1218
        %1220 = vrot.lane.b32.xlu0 %v1219, 24
        %v1221 = vpop.permute.xlu0 %1220
        %vm1223 = vcmask 257216
        %1224 = vst.msk [vmem:[#allocation4] sm:$0xf] %vm1223, %v1221
        %v1225 = vld [vmem:[#allocation4] sm:$0xf]
        %v1226 = vld [vmem:[%s9] sm:$0xf]
        %v1227 = vld [vmem:[%s9 + $0x4] sm:$0xf]
        %v1228 = vld [vmem:[%s9 + $0x8] sm:$0xf]
        %v1229 = vld [vmem:[%s9 + $0xc] sm:$0xf]
        %v1230 = vld [vmem:[%s10] sm:$0x1]
        %v1232 = vlaneseq
        %v1233 = vshrl.u32 %v1232, 7
        %v1234 = vsub.s32 0, %v1233
        %v1235 = vrot.slane %v1230, %v1234
        %v1241 = vunpack.c.l.b16 %v1226
        %v1242 = vunpack.c.l.b16 %v1227
        %v1243 = vunpack.c.l.b16 %v1228
        %v1244 = vunpack.c.l.b16 %v1229
        %v1245 = vpack.c.b16 %v1242, %v1241
        %v1246 = vpack.c.b16 %v1244, %v1243
        %v1250 = vsel %vm704, %v1225, 0
        %1252 = vmatprep.subr.bf16.mxu0 0
        %1253 = vmatpush1.bf16.msra.mxu0 %v1245
        %1254 = vmatprep.subr.bf16.mxu0 0
        %1255 = vmatpush1.bf16.msra.mxu0 %v1246
        %1256 = vmatprep.subr.bf16.mxu0 0
        %1257 = vmatpush1.bf16.msra.mxu0 0
        %1258 = vmatprep.subr.bf16.mxu0 0
        %1259 = vmatpush1.bf16.msra.mxu0 0
        %1260 = vmatprep.subr.bf16.mxu0 0
        %1261 = vmatpush1.bf16.msra.mxu0 0
        %1262 = vmatprep.subr.bf16.mxu0 0
        %1263 = vmatpush1.bf16.msra.mxu0 0
        %1264 = vmatprep.subr.bf16.mxu0 0
        %1265 = vmatpush1.bf16.msra.mxu0 0
        %1266 = vmatprep.subr.bf16.mxu0 0
        %1267 = vmatpush1.bf16.msra.mxu0 0
        %1268 = vmatprep.subr.bf16.mxu0 0
        %1269 = vmatpush1.bf16.msra.mxu0 0
        %1270 = vmatprep.subr.bf16.mxu0 0
        %1271 = vmatpush1.bf16.msra.mxu0 0
        %1272 = vmatprep.subr.bf16.mxu0 0
        %1273 = vmatpush1.bf16.msra.mxu0 0
        %1274 = vmatprep.subr.bf16.mxu0 0
        %1275 = vmatpush1.bf16.msra.mxu0 0
        %1276 = vmatprep.subr.bf16.mxu0 0
        %1277 = vmatpush1.bf16.msra.mxu0 0
        %1278 = vmatprep.subr.bf16.mxu0 0
        %1279 = vmatpush1.bf16.msra.mxu0 0
        %1280 = vmatprep.subr.bf16.mxu0 0
        %1281 = vmatpush1.bf16.msra.mxu0 0
        %1282 = vmatprep.subr.bf16.mxu0 0
        %1283 = vmatpush1.bf16.msra.mxu0 0
        %1284 = vmatprep.mubr.bf16.mxu0 0
        %1285 = vmatmul.mubr.bf16.gmra.mrb[0].mxu0 %v1250
        %v1286 = vpop.f32.mrb[0].mxu0
        %v1287 = vadd.f32 %v1235, %v1286
        %v1288 = vpop.f32.mrb[0].mxu0
        %v1289 = vpop.f32.mrb[0].mxu0
        %v1290 = vpop.f32.mrb[0].mxu0
        %1291 = vdwg.mxu0
        %1292 = vst.msk [vmem:[%s531] sm:$0xff] %vm704, %v1287
        %s1293 = sand.u32 %s303, 1
        %s1294 = scalar_lea.sflag [#allocation7], %s1293
        %s1295 = sand.u32 %s303, 1
        %s1296 = smul.addr %s1295, 8
        %s1297 = scalar_lea.vmem [#allocation16], %s1296
        // Predicated region
        $region93: #{tpu_custom_call.1} parent=63 // pred_check
          %p1298 = pneg %p313
        $region94: #{tpu_custom_call.1} parent=63 // pred_check_branch
          %1300 = sbr.rel (%p1298) target = $region96
        $region95: #{tpu_custom_call.1} parent=63 // pred_region
          %s1302 = ssub.s32 128, 128
          %1303 = vsyncadd %s1294, %s1302
          %s1304 = sadd.s32 %s38, %s37
          %s1305 = smul.addr %s1304, 128
          %s1306 = scalar_lea.hbm %s11, %s1305
          %s1308 = sshll.u32 %s1297, 4
          %s1309 = int_to_ptr.vmem [resolvable:$true] %s1308
          %1311 = dma.vmem_to_hbm [thread:$0]  %s1309, 128, %s1306, %s1294
        $region96: #{tpu_custom_call.1} parent=63 // pred_fallthru
          _
      $region64: #{tpu_custom_call.1} parent=5 // pred_fallthru
        _
      %p1312 = scmp.le.s32.totalorder 2, %s28
      // Predicated region
      $region97: #{tpu_custom_call.1} parent=5 // pred_check
        %p1313 = pneg %p1312
      $region98: #{tpu_custom_call.1} parent=5 // pred_check_branch
        %1315 = sbr.rel (%p1313) target = $region100
      $region99: #{tpu_custom_call.1} parent=5 // pred_region
        %s1316 = ssub.s32 %s28, 2
        // Predicated region
        $region101: #{tpu_custom_call.1} parent=99 // pred_check
          %p1317 = pneg %p319
        $region102: #{tpu_custom_call.1} parent=99 // pred_check_branch
          %1319 = sbr.rel (%p1317) target = $region104
        $region103: #{tpu_custom_call.1} parent=99 // pred_region
          %s1320 = sand.u32 %s304, 1
          %s1321 = scalar_lea.sflag [#allocation7], %s1320
          %s1322 = sand.u32 %s304, 1
          %s1323 = smul.addr %s1322, 8
          %s1324 = scalar_lea.vmem [#allocation16], %s1323
          %1325 = dma.done %s1321, 128
        $region104: #{tpu_custom_call.1} parent=99 // pred_fallthru
          _
      $region100: #{tpu_custom_call.1} parent=5 // pred_fallthru
        _
    $region6: #{tpu_custom_call.1} parent=1 // loop_footer
      %s32 = sadd.s32 1, %s28
    $region7: #{tpu_custom_call.1} parent=1 // loop_footer_branch
      %27 = sbr.rel target = $region3
    $region8: #{tpu_custom_call.1} parent=1 // loop_exit
      _
    %1326 = vsyncpa [#allocation6], 1
    %s1327 = scalar_lea.sflag [#allocation6], 1
    %1328 = vsyncpa %s1327, 1
    %1329 = vsyncpa [#allocation9], 1
    %s1330 = scalar_lea.sflag [#allocation9], 1
    %1331 = vsyncpa %s1330, 1
    %1332 = vsyncpa [#allocation12], 1
    %1333 = vsyncpa [#allocation15], 1
    %1334 = vsyncpa [#allocation7], 1
    %s1335 = scalar_lea.sflag [#allocation7], 1
    %1336 = vsyncpa %s1335, 1

</llo_original>
